<compile_context>
chip_gen: v7x
topology: tpu7x:2x2x1
jax: 0.10.0
libtpu: 0.0.40
codegen_flags: <defaults>
</compile_context>

<pallas_src>
import jax
import jax.numpy as jnp
from jax.experimental import pallas as pl
from jax.experimental.pallas import tpu as pltpu

Z_DIM = 32
HIDDEN = 512
MAX_TILE_B = 2048   # large enough to amortize ~0.35 us/step overhead on v6e/v7x
ROW_ALIGN = 256     # full MXU rows on v6e/v7x (and a multiple of v5e's 128)


def d_net_gauss_kernel(x_ref, w1_ref, b1_ref, w2_ref, b2_ref, w3_ref, b3_ref,
                       o_ref):
    """Forward pass for one batch tile; weights stay VMEM-resident."""
    # Linear(32, 512) + ReLU.  x arrives already in bf16; f32 MXU accumulate,
    # f32 elementwise (v5e VPU has no bf16).
    h1 = jnp.dot(x_ref[...], w1_ref[...],
                 preferred_element_type=jnp.float32) + b1_ref[...]
    # TODO(synk): nn.Dropout(0.5) is identity in eval mode; training-mode
    # stochastic masking (pltpu.prng_seed/prng_random_bits + 2x rescale) is
    # not applied -- this kernel is inference-only.
    h1 = jnp.maximum(h1, 0.0)

    # Linear(512, 512) + ReLU (bf16 operands, f32 accumulate).
    h2 = jnp.dot(h1.astype(jnp.bfloat16), w2_ref[...],
                 preferred_element_type=jnp.float32) + b2_ref[...]
    h2 = jnp.maximum(h2, 0.0)

    # Linear(512, 1) + sigmoid.  An N=1 matmul wastes a full MXU pass, so do it
    # as a VPU broadcast-multiply + lane reduction (XLU) in f32 instead.
    logits = jnp.sum(h2 * w3_ref[...], axis=-1, keepdims=True) + b3_ref[...]
    o_ref[...] = jax.nn.sigmoid(logits).astype(o_ref.dtype)


def _round_up(n, m):
    return ((n + m - 1) // m) * m


def d_net_gauss(x, params, *, max_tile_b=MAX_TILE_B):
    """x: (B, Z_DIM) float32 -> (B, 1) float32 probabilities."""
    w1, b1, w2, b2, w3_row, b3 = params
    B = x.shape[0]

    # --- adaptive batch tiling -------------------------------------------
    # Round the batch up to ROW_ALIGN (full MXU rows, satisfies the sublane
    # constraint) and pick a tile so that
    #   * tiny batches get one small tile (no padding to the full 2048),
    #   * anything bigger splits into >= 2 tiles (v7x two-TensorCore split),
    #   * tiles never exceed max_tile_b (VMEM / pipeline granularity).
    bp_min = _round_up(B, ROW_ALIGN)
    n_min = max(1 if bp_min <= ROW_ALIGN else 2, pl.cdiv(bp_min, max_tile_b))
    tile_b = _round_up(pl.cdiv(bp_min, n_min), ROW_ALIGN)
    num_tiles = pl.cdiv(bp_min, tile_b)
    Bp = num_tiles * tile_b

    # Stream x as bf16 (MXU operand dtype): halves the per-step HBM read.
    x = x.astype(jnp.bfloat16)
    if Bp != B:
        # Padded rows run through the full network (finite garbage) and are
        # sliced off below -- do not reduce over the padded output.
        x = jnp.pad(x, ((0, Bp - B), (0, 0)))

    resident = lambda shape: pl.BlockSpec(shape, lambda i: (0,) * len(shape))

    out = pl.pallas_call(
        d_net_gauss_kernel,
        out_shape=jax.ShapeDtypeStruct((Bp, 1), jnp.float32),
        grid=(num_tiles,),
        in_specs=[
            pl.BlockSpec((tile_b, Z_DIM), lambda i: (i, 0)),   # x: streamed
            resident(w1.shape), resident(b1.shape),            # weights/biases:
            resident(w2.shape), resident(b2.shape),            #   VMEM-resident
            resident(w3_row.shape), resident(b3.shape),        #   across tiles
        ],
        out_specs=pl.BlockSpec((tile_b, 1), lambda i: (i, 0)),
        compiler_params=pltpu.CompilerParams(
            dimension_semantics=("parallel",),        # split tiles across TCs
            vmem_limit_bytes=32 * 1024 * 1024,        # headroom for big tiles,
        ),                                            # safe on v5e/v6e/v7x
    )(x, w1, b1, w2, b2, w3_row, b3)

    return out[:B]


def init_params(key):
    """PyTorch nn.Linear default init (uniform +-1/sqrt(fan_in)).

    Matmul weights stored pre-transposed as (in, out) in bf16; biases in f32;
    the final 512->1 weight stored as an f32 (1, 512) row for the VPU reduce."""
    ks = jax.random.split(key, 6)

    def linear(kw, kb, fan_in, fan_out, w_dtype):
        bound = 1.0 / jnp.sqrt(fan_in)
        w = jax.random.uniform(kw, (fan_in, fan_out), jnp.float32, -bound, bound)
        b = jax.random.uniform(kb, (1, fan_out), jnp.float32, -bound, bound)
        return w.astype(w_dtype), b

    w1, b1 = linear(ks[0], ks[1], Z_DIM, HIDDEN, jnp.bfloat16)
    w2, b2 = linear(ks[2], ks[3], HIDDEN, HIDDEN, jnp.bfloat16)
    w3, b3 = linear(ks[4], ks[5], HIDDEN, 1, jnp.float32)
    w3_row = w3.reshape(1, HIDDEN)          # (1, 512) row for lane reduction
    b3 = b3.reshape(1, 1)
    return (w1, b1, w2, b2, w3_row, b3)


if __name__ == "__main__":
    key = jax.random.PRNGKey(0)
    k_x, k_p = jax.random.split(key)

    B = 8  # small demo batch (padded only up to 256 rows inside the wrapper)
    x = jax.random.normal(k_x, (B, Z_DIM), dtype=jnp.float32)
    params = init_params(k_p)

    out = d_net_gauss(x, params)
    out = jax.block_until_ready(out)
    assert out.shape == (B, 1)

    # Reference with matching bf16 matmul operands / f32 accumulation.
    w1, b1, w2, b2, w3_row, b3 = params
    xb = x.astype(jnp.bfloat16)
    h1 = jnp.maximum(
        jnp.dot(xb, w1, preferred_element_type=jnp.float32) + b1, 0.0)
    h2 = jnp.maximum(
        jnp.dot(h1.astype(jnp.bfloat16), w2, preferred_element_type=jnp.float32)
        + b2, 0.0)
    ref = jax.nn.sigmoid(jnp.sum(h2 * w3_row, axis=-1, keepdims=True) + b3)
    assert jnp.allclose(out, ref, atol=1e-3), "mismatch vs bf16 reference"

    # Looser sanity check against a full-f32 reference (semantics of the module).
    w1f, w2f = w1.astype(jnp.float32), w2.astype(jnp.float32)
    h1f = jnp.maximum(x @ w1f + b1, 0.0)
    h2f = jnp.maximum(h1f @ w2f + b2, 0.0)
    ref_f32 = jax.nn.sigmoid(jnp.sum(h2f * w3_row, -1, keepdims=True) + b3)
    assert jnp.allclose(out, ref_f32, atol=2e-2), "mismatch vs f32 reference"

    print("KERNEL_OK")
</pallas_src>

<mosaic_0001>
module attributes {stable_mosaic.version = 11 : i64} {
  func.func @d_net_gauss_kernel(%arg0: i32, %arg1: memref<256x32xbf16, #tpu.memory_space<vmem>>, %arg2: memref<32x512xbf16, #tpu.memory_space<vmem>>, %arg3: memref<1x512xf32, #tpu.memory_space<vmem>>, %arg4: memref<512x512xbf16, #tpu.memory_space<vmem>>, %arg5: memref<1x512xf32, #tpu.memory_space<vmem>>, %arg6: memref<1x512xf32, #tpu.memory_space<vmem>>, %arg7: memref<1x1xf32, #tpu.memory_space<vmem>>, %arg8: memref<256x1xf32, #tpu.memory_space<vmem>>) attributes {dimension_semantics = [#tpu.dimension_semantics<parallel>], iteration_bounds = array<i64: 1>, scalar_prefetch = 0 : i64, scratch_operands = 0 : i64, tpu.core_type = #tpu.core_type<tc>, window_params = [{transform_indices = @transform_0, window_bounds = array<i64: 256, 32>}, {pipeline_mode = #tpu.pipeline_mode<synchronous>, transform_indices = @transform_1, window_bounds = array<i64: 32, 512>}, {pipeline_mode = #tpu.pipeline_mode<synchronous>, transform_indices = @transform_2, window_bounds = array<i64: 1, 512>}, {pipeline_mode = #tpu.pipeline_mode<synchronous>, transform_indices = @transform_3, window_bounds = array<i64: 512, 512>}, {pipeline_mode = #tpu.pipeline_mode<synchronous>, transform_indices = @transform_4, window_bounds = array<i64: 1, 512>}, {pipeline_mode = #tpu.pipeline_mode<synchronous>, transform_indices = @transform_5, window_bounds = array<i64: 1, 512>}, {pipeline_mode = #tpu.pipeline_mode<synchronous>, transform_indices = @transform_6, window_bounds = array<i64: 1, 1>}, {transform_indices = @transform_7, window_bounds = array<i64: 256, 1>}]} {
    %c0 = arith.constant 0 : index
    %c0_0 = arith.constant 0 : index
    %0 = vector.load %arg1[%c0, %c0_0] : memref<256x32xbf16, #tpu.memory_space<vmem>>, vector<256x32xbf16>
    %c0_1 = arith.constant 0 : index
    %c0_2 = arith.constant 0 : index
    %1 = vector.load %arg2[%c0_1, %c0_2] : memref<32x512xbf16, #tpu.memory_space<vmem>>, vector<32x512xbf16>
    %cst = arith.constant dense<0.000000e+00> : vector<256x512xf32>
    %2 = tpu.matmul %0, %1, %cst {dimension_numbers = #tpu.dot_dimension_numbers<[1], [0], [0], [1], [0, 0, 1, 1], [], []>} : vector<256x32xbf16>, vector<32x512xbf16>, vector<256x512xf32> -> vector<256x512xf32>
    %c0_3 = arith.constant 0 : index
    %c0_4 = arith.constant 0 : index
    %3 = vector.load %arg3[%c0_3, %c0_4] : memref<1x512xf32, #tpu.memory_space<vmem>>, vector<1x512xf32>
    %4 = vector.broadcast %3 : vector<1x512xf32> to vector<256x512xf32>
    %5 = arith.addf %2, %4 : vector<256x512xf32>
    %cst_5 = arith.constant 0.000000e+00 : f32
    %6 = vector.broadcast %cst_5 : f32 to vector<256x512xf32>
    %7 = arith.maximumf %5, %6 : vector<256x512xf32>
    %8 = arith.truncf %7 : vector<256x512xf32> to vector<256x512xbf16>
    %c0_6 = arith.constant 0 : index
    %c0_7 = arith.constant 0 : index
    %9 = vector.load %arg4[%c0_6, %c0_7] : memref<512x512xbf16, #tpu.memory_space<vmem>>, vector<512x512xbf16>
    %cst_8 = arith.constant dense<0.000000e+00> : vector<256x512xf32>
    %10 = tpu.matmul %8, %9, %cst_8 {dimension_numbers = #tpu.dot_dimension_numbers<[1], [0], [0], [1], [0, 0, 1, 1], [], []>} : vector<256x512xbf16>, vector<512x512xbf16>, vector<256x512xf32> -> vector<256x512xf32>
    %c0_9 = arith.constant 0 : index
    %c0_10 = arith.constant 0 : index
    %11 = vector.load %arg5[%c0_9, %c0_10] : memref<1x512xf32, #tpu.memory_space<vmem>>, vector<1x512xf32>
    %12 = vector.broadcast %11 : vector<1x512xf32> to vector<256x512xf32>
    %13 = arith.addf %10, %12 : vector<256x512xf32>
    %cst_11 = arith.constant 0.000000e+00 : f32
    %14 = vector.broadcast %cst_11 : f32 to vector<256x512xf32>
    %15 = arith.maximumf %13, %14 : vector<256x512xf32>
    %c0_12 = arith.constant 0 : index
    %c0_13 = arith.constant 0 : index
    %16 = vector.load %arg6[%c0_12, %c0_13] : memref<1x512xf32, #tpu.memory_space<vmem>>, vector<1x512xf32>
    %17 = vector.broadcast %16 : vector<1x512xf32> to vector<256x512xf32>
    %18 = arith.mulf %15, %17 : vector<256x512xf32>
    %cst_14 = arith.constant dense<0.000000e+00> : vector<256xf32>
    %19 = vector.multi_reduction <add>, %18, %cst_14 [1] : vector<256x512xf32> to vector<256xf32>
    %20 = vector.shape_cast %19 : vector<256xf32> to vector<256x1xf32>
    %c0_15 = arith.constant 0 : index
    %c0_16 = arith.constant 0 : index
    %21 = vector.load %arg7[%c0_15, %c0_16] : memref<1x1xf32, #tpu.memory_space<vmem>>, vector<1x1xf32>
    %22 = vector.broadcast %21 : vector<1x1xf32> to vector<256x1xf32>
    %23 = arith.addf %20, %22 : vector<256x1xf32>
    %24 = arith.negf %23 : vector<256x1xf32>
    %25 = math.exp %24 : vector<256x1xf32>
    %cst_17 = arith.constant 1.000000e+00 : f32
    %26 = vector.broadcast %cst_17 : f32 to vector<256x1xf32>
    %27 = arith.addf %26, %25 : vector<256x1xf32>
    %28 = arith.divf %26, %27 : vector<256x1xf32>
    %c0_18 = arith.constant 0 : index
    %c0_19 = arith.constant 0 : index
    %29 = vector.load %arg8[%c0_18, %c0_19] : memref<256x1xf32, #tpu.memory_space<vmem>>, vector<256x1xf32>
    tpu.vector_store %arg8[%c0_18, %c0_19], %28 {strides = array<i32>} : memref<256x1xf32, #tpu.memory_space<vmem>>, vector<256x1xf32>,
    return
  }
  func.func @transform_0(%arg0: i32) -> (i32, i32) {
    %c0_i32 = arith.constant 0 : i32
    %c0_i32_0 = arith.constant 0 : i32
    return %arg0, %c0_i32 : i32, i32
  }
  func.func @transform_1(%arg0: i32) -> (i32, i32) {
    %c0_i32 = arith.constant 0 : i32
    %c0_i32_0 = arith.constant 0 : i32
    %c0_i32_1 = arith.constant 0 : i32
    return %c0_i32, %c0_i32_0 : i32, i32
  }
  func.func @transform_2(%arg0: i32) -> (i32, i32) {
    %c0_i32 = arith.constant 0 : i32
    %c0_i32_0 = arith.constant 0 : i32
    %c0_i32_1 = arith.constant 0 : i32
    return %c0_i32, %c0_i32_0 : i32, i32
  }
  func.func @transform_3(%arg0: i32) -> (i32, i32) {
    %c0_i32 = arith.constant 0 : i32
    %c0_i32_0 = arith.constant 0 : i32
    %c0_i32_1 = arith.constant 0 : i32
    return %c0_i32, %c0_i32_0 : i32, i32
  }
  func.func @transform_4(%arg0: i32) -> (i32, i32) {
    %c0_i32 = arith.constant 0 : i32
    %c0_i32_0 = arith.constant 0 : i32
    %c0_i32_1 = arith.constant 0 : i32
    return %c0_i32, %c0_i32_0 : i32, i32
  }
  func.func @transform_5(%arg0: i32) -> (i32, i32) {
    %c0_i32 = arith.constant 0 : i32
    %c0_i32_0 = arith.constant 0 : i32
    %c0_i32_1 = arith.constant 0 : i32
    return %c0_i32, %c0_i32_0 : i32, i32
  }
  func.func @transform_6(%arg0: i32) -> (i32, i32) {
    %c0_i32 = arith.constant 0 : i32
    %c0_i32_0 = arith.constant 0 : i32
    %c0_i32_1 = arith.constant 0 : i32
    return %c0_i32, %c0_i32_0 : i32, i32
  }
  func.func @transform_7(%arg0: i32) -> (i32, i32) {
    %c0_i32 = arith.constant 0 : i32
    %c0_i32_0 = arith.constant 0 : i32
    return %arg0, %c0_i32 : i32, i32
  }
}

</mosaic_0001>

<llo_original>
// kernel: tpu_custom_call.1
$region0: #{tpu_custom_call.1}
  #allocation0 [shape = 'u32[]', space=smem, size = 0x4, offset = 0x4, fixed_abs, tag = 'smem constant byte address 0x4 - core index']
  #allocation1 [shape = 'u32[144,128]{1,0:T(1,128)}', space=vmem, size = 0x12000, scoped, tag = 'internal scratch']
  #allocation2 [shape = 'f32[1,1]{1,0:T(1,128)S(1)}', space=vmem, size = 0x200, scoped, tag = 'scoped memory for tpu_custom_call.1']
  %s0 = inlined_call_operand.vmem [shape: bf16[256,32], index: 0, kind: input, shape index: {}]
  %s1 = inlined_call_operand.vmem [shape: bf16[32,512], index: 1, kind: input, shape index: {}]
  %s2 = inlined_call_operand.vmem [shape: f32[1,512], index: 2, kind: input, shape index: {}]
  %s3 = inlined_call_operand.hbm [shape: bf16[512,512], index: 3, kind: input, shape index: {}]
  %s4 = inlined_call_operand.vmem [shape: f32[1,512], index: 4, kind: input, shape index: {}]
  %s5 = inlined_call_operand.vmem [shape: f32[1,512], index: 5, kind: input, shape index: {}]
  %s6 = inlined_call_operand.<no memory space> [shape: f32[1,1], index: 6, kind: input, shape index: {}]
  %s7 = inlined_call_operand.vmem [shape: f32[256,1], index: 7, kind: output, shape index: {}]
  %s8 = sld [smem:[#allocation0]]
  $region42: #{tpu_custom_call.1} parent=0
    _
  %s10 = ssub.s32 1, %s8
  %s11 = scalar_select 0, %s10, %s8
  %v12 = vstv %s6
  %13 = vst [vmem:[#allocation2] sm:$0x1] %v12
  $region1: #{tpu_custom_call.1} parent=0
    #allocation3 [shape = 'u8[524288]{0}', space=vmem, size = 0x80000, scoped, tag = 'input window, operand 3, single buffered']
    #allocation4 [shape = 's32[1]{0}', space=sflag, size = 0x4, scoped, tag = 'scoped memory for tpu_custom_call.1']
    %14 = vsyncpa [#allocation4], 0
    // Predicated region
    $region2: #{tpu_custom_call.1} parent=1 // pred_check
      _
    $region3: #{tpu_custom_call.1} parent=1 // pred_check_branch
      %16 = sbr.rel (0) target = $region5
    $region4: #{tpu_custom_call.1} parent=1 // pred_region
      _
    $region5: #{tpu_custom_call.1} parent=1 // pred_fallthru
      _
    // Predicated region
    $region6: #{tpu_custom_call.1} parent=1 // pred_check
      _
    $region7: #{tpu_custom_call.1} parent=1 // pred_check_branch
      %18 = sbr.rel (0) target = $region9
    $region8: #{tpu_custom_call.1} parent=1 // pred_region
      _
    $region9: #{tpu_custom_call.1} parent=1 // pred_fallthru
      _
    // Predicated region
    $region10: #{tpu_custom_call.1} parent=1 // pred_check
      _
    $region11: #{tpu_custom_call.1} parent=1 // pred_check_branch
      %20 = sbr.rel (0) target = $region13
    $region12: #{tpu_custom_call.1} parent=1 // pred_region
      _
    $region13: #{tpu_custom_call.1} parent=1 // pred_fallthru
      _
    // Predicated region
    $region14: #{tpu_custom_call.1} parent=1 // pred_check
      _
    $region15: #{tpu_custom_call.1} parent=1 // pred_check_branch
      %22 = sbr.rel (0) target = $region17
    $region16: #{tpu_custom_call.1} parent=1 // pred_region
      %s24 = ssub.s32 16384, 16384
      %25 = vsyncadd [#allocation4], %s24
      %s26 = sshll.u32 [#allocation3], 4
      %s27 = int_to_ptr.vmem [resolvable:$true] %s26
      %32 = dma.hbm_to_vmem [thread:$0]  %s3, 16384, %s27, [#allocation4], 256, 256, 16
    $region17: #{tpu_custom_call.1} parent=1 // pred_fallthru
      _
    // Predicated region
    $region18: #{tpu_custom_call.1} parent=1 // pred_check
      _
    $region19: #{tpu_custom_call.1} parent=1 // pred_check_branch
      %34 = sbr.rel (0) target = $region21
    $region20: #{tpu_custom_call.1} parent=1 // pred_region
      _
    $region21: #{tpu_custom_call.1} parent=1 // pred_fallthru
      _
    // Predicated region
    $region22: #{tpu_custom_call.1} parent=1 // pred_check
      _
    $region23: #{tpu_custom_call.1} parent=1 // pred_check_branch
      %36 = sbr.rel (0) target = $region25
    $region24: #{tpu_custom_call.1} parent=1 // pred_region
      _
    $region25: #{tpu_custom_call.1} parent=1 // pred_fallthru
      _
    // Predicated region
    $region26: #{tpu_custom_call.1} parent=1 // pred_check
      _
    $region27: #{tpu_custom_call.1} parent=1 // pred_check_branch
      %38 = sbr.rel (0) target = $region29
    $region28: #{tpu_custom_call.1} parent=1 // pred_region
      _
    $region29: #{tpu_custom_call.1} parent=1 // pred_fallthru
      _
    // Predicated region
    $region30: #{tpu_custom_call.1} parent=1 // pred_check
      _
    $region31: #{tpu_custom_call.1} parent=1 // pred_check_branch
      %40 = sbr.rel (0) target = $region33
    $region32: #{tpu_custom_call.1} parent=1 // pred_region
      %41 = dma.done [#allocation4], 16384
    $region33: #{tpu_custom_call.1} parent=1 // pred_fallthru
      _
    %v43 = vld [vmem:[%s0] sm:$0xf]
    %v44 = vld [vmem:[%s0 + $0x4] sm:$0xf]
    %v45 = vld [vmem:[%s0 + $0x8] sm:$0xf]
    %v46 = vld [vmem:[%s0 + $0xc] sm:$0xf]
    %v47 = vld [vmem:[%s0 + $0x10] sm:$0xf]
    %v48 = vld [vmem:[%s0 + $0x14] sm:$0xf]
    %v49 = vld [vmem:[%s0 + $0x18] sm:$0xf]
    %v50 = vld [vmem:[%s0 + $0x1c] sm:$0xf]
    %v51 = vld [vmem:[%s0 + $0x20] sm:$0xf]
    %v52 = vld [vmem:[%s0 + $0x24] sm:$0xf]
    %v53 = vld [vmem:[%s0 + $0x28] sm:$0xf]
    %v54 = vld [vmem:[%s0 + $0x2c] sm:$0xf]
    %v55 = vld [vmem:[%s0 + $0x30] sm:$0xf]
    %v56 = vld [vmem:[%s0 + $0x34] sm:$0xf]
    %v57 = vld [vmem:[%s0 + $0x38] sm:$0xf]
    %v58 = vld [vmem:[%s0 + $0x3c] sm:$0xf]
    %v59 = vld [vmem:[%s0 + $0x40] sm:$0xf]
    %v60 = vld [vmem:[%s0 + $0x44] sm:$0xf]
    %v61 = vld [vmem:[%s0 + $0x48] sm:$0xf]
    %v62 = vld [vmem:[%s0 + $0x4c] sm:$0xf]
    %v63 = vld [vmem:[%s0 + $0x50] sm:$0xf]
    %v64 = vld [vmem:[%s0 + $0x54] sm:$0xf]
    %v65 = vld [vmem:[%s0 + $0x58] sm:$0xf]
    %v66 = vld [vmem:[%s0 + $0x5c] sm:$0xf]
    %v67 = vld [vmem:[%s0 + $0x60] sm:$0xf]
    %v68 = vld [vmem:[%s0 + $0x64] sm:$0xf]
    %v69 = vld [vmem:[%s0 + $0x68] sm:$0xf]
    %v70 = vld [vmem:[%s0 + $0x6c] sm:$0xf]
    %v71 = vld [vmem:[%s0 + $0x70] sm:$0xf]
    %v72 = vld [vmem:[%s0 + $0x74] sm:$0xf]
    %v73 = vld [vmem:[%s0 + $0x78] sm:$0xf]
    %v74 = vld [vmem:[%s0 + $0x7c] sm:$0xf]
    %v75 = vld [vmem:[%s1] sm:$0xff]
    %v76 = vld [vmem:[%s1 + $0x8] sm:$0xff]
    %v77 = vld [vmem:[%s1 + $0x10] sm:$0xff]
    %v78 = vld [vmem:[%s1 + $0x18] sm:$0xff]
    %v79 = vld [vmem:[%s1 + $0x20] sm:$0xff]
    %v80 = vld [vmem:[%s1 + $0x28] sm:$0xff]
    %v81 = vld [vmem:[%s1 + $0x30] sm:$0xff]
    %v82 = vld [vmem:[%s1 + $0x38] sm:$0xff]
    %v83 = vld [vmem:[%s2] sm:$0xf]
    %v85 = vlaneseq
    %v86 = vshrl.u32 %v85, 7
    %v87 = vsub.s32 0, %v86
    %v88 = vrot.slane %v83, %v87
    %v89 = vlaneseq
    %v90 = vshrl.u32 %v89, 7
    %v91 = vsub.s32 1, %v90
    %v92 = vrot.slane %v83, %v91
    %v93 = vlaneseq
    %v94 = vshrl.u32 %v93, 7
    %v95 = vsub.s32 2, %v94
    %v96 = vrot.slane %v83, %v95
    %v97 = vlaneseq
    %v98 = vshrl.u32 %v97, 7
    %v99 = vsub.s32 3, %v98
    %v100 = vrot.slane %v83, %v99
    %v137 = vunpack.c.l.b16 %v43
    %v138 = vunpack.c.l.b16 %v44
    %v139 = vunpack.c.l.b16 %v45
    %v140 = vunpack.c.l.b16 %v46
    %v141 = vunpack.c.l.b16 %v47
    %v142 = vunpack.c.l.b16 %v48
    %v143 = vunpack.c.l.b16 %v49
    %v144 = vunpack.c.l.b16 %v50
    %v145 = vunpack.c.l.b16 %v51
    %v146 = vunpack.c.l.b16 %v52
    %v147 = vunpack.c.l.b16 %v53
    %v148 = vunpack.c.l.b16 %v54
    %v149 = vunpack.c.l.b16 %v55
    %v150 = vunpack.c.l.b16 %v56
    %v151 = vunpack.c.l.b16 %v57
    %v152 = vunpack.c.l.b16 %v58
    %v153 = vunpack.c.l.b16 %v59
    %v154 = vunpack.c.l.b16 %v60
    %v155 = vunpack.c.l.b16 %v61
    %v156 = vunpack.c.l.b16 %v62
    %v157 = vunpack.c.l.b16 %v63
    %v158 = vunpack.c.l.b16 %v64
    %v159 = vunpack.c.l.b16 %v65
    %v160 = vunpack.c.l.b16 %v66
    %v161 = vunpack.c.l.b16 %v67
    %v162 = vunpack.c.l.b16 %v68
    %v163 = vunpack.c.l.b16 %v69
    %v164 = vunpack.c.l.b16 %v70
    %v165 = vunpack.c.l.b16 %v71
    %v166 = vunpack.c.l.b16 %v72
    %v167 = vunpack.c.l.b16 %v73
    %v168 = vunpack.c.l.b16 %v74
    %v169 = vpack.c.b16 %v138, %v137
    %v170 = vpack.c.b16 %v140, %v139
    %v171 = vpack.c.b16 %v142, %v141
    %v172 = vpack.c.b16 %v144, %v143
    %v173 = vpack.c.b16 %v146, %v145
    %v174 = vpack.c.b16 %v148, %v147
    %v175 = vpack.c.b16 %v150, %v149
    %v176 = vpack.c.b16 %v152, %v151
    %v177 = vpack.c.b16 %v154, %v153
    %v178 = vpack.c.b16 %v156, %v155
    %v179 = vpack.c.b16 %v158, %v157
    %v180 = vpack.c.b16 %v160, %v159
    %v181 = vpack.c.b16 %v162, %v161
    %v182 = vpack.c.b16 %v164, %v163
    %v183 = vpack.c.b16 %v166, %v165
    %v184 = vpack.c.b16 %v168, %v167
    %v193 = vunpack.c.l.b16 %v75
    %v194 = vunpack.c.h.b16 %v75
    %v195 = vunpack.c.l.b16 %v76
    %v196 = vunpack.c.h.b16 %v76
    %v197 = vunpack.c.l.b16 %v77
    %v198 = vunpack.c.h.b16 %v77
    %v199 = vunpack.c.l.b16 %v78
    %v200 = vunpack.c.h.b16 %v78
    %v201 = vunpack.c.l.b16 %v79
    %v202 = vunpack.c.h.b16 %v79
    %v203 = vunpack.c.l.b16 %v80
    %v204 = vunpack.c.h.b16 %v80
    %v205 = vunpack.c.l.b16 %v81
    %v206 = vunpack.c.h.b16 %v81
    %v207 = vunpack.c.l.b16 %v82
    %v208 = vunpack.c.h.b16 %v82
    %v209 = vpack.c.b16 %v197, %v193
    %v210 = vpack.c.b16 %v198, %v194
    %v211 = vpack.c.b16 %v199, %v195
    %v212 = vpack.c.b16 %v200, %v196
    %v213 = vpack.c.b16 %v205, %v201
    %v214 = vpack.c.b16 %v206, %v202
    %v215 = vpack.c.b16 %v207, %v203
    %v216 = vpack.c.b16 %v208, %v204
    %vm225 = vcmask 261120
    %v227 = vsel %vm225, %v169, 0
    %v230 = vsel %vm225, %v170, 0
    %v233 = vsel %vm225, %v171, 0
    %v236 = vsel %vm225, %v172, 0
    %v239 = vsel %vm225, %v173, 0
    %v242 = vsel %vm225, %v174, 0
    %v245 = vsel %vm225, %v175, 0
    %v248 = vsel %vm225, %v176, 0
    %v251 = vsel %vm225, %v177, 0
    %v254 = vsel %vm225, %v178, 0
    %v257 = vsel %vm225, %v179, 0
    %v260 = vsel %vm225, %v180, 0
    %v263 = vsel %vm225, %v181, 0
    %v266 = vsel %vm225, %v182, 0
    %v269 = vsel %vm225, %v183, 0
    %v272 = vsel %vm225, %v184, 0
    %274 = vmatprep.subr.bf16.mxu0 %v210
    %275 = vmatpush1.bf16.msra.mxu0 %v209
    %276 = vmatprep.subr.bf16.mxu0 %v214
    %277 = vmatpush1.bf16.msra.mxu0 %v213
    %278 = vmatprep.subr.bf16.mxu0 0
    %279 = vmatpush1.bf16.msra.mxu0 0
    %280 = vmatprep.subr.bf16.mxu0 0
    %281 = vmatpush1.bf16.msra.mxu0 0
    %282 = vmatprep.subr.bf16.mxu0 0
    %283 = vmatpush1.bf16.msra.mxu0 0
    %284 = vmatprep.subr.bf16.mxu0 0
    %285 = vmatpush1.bf16.msra.mxu0 0
    %286 = vmatprep.subr.bf16.mxu0 0
    %287 = vmatpush1.bf16.msra.mxu0 0
    %288 = vmatprep.subr.bf16.mxu0 0
    %289 = vmatpush1.bf16.msra.mxu0 0
    %290 = vmatprep.subr.bf16.mxu0 0
    %291 = vmatpush1.bf16.msra.mxu0 0
    %292 = vmatprep.subr.bf16.mxu0 0
    %293 = vmatpush1.bf16.msra.mxu0 0
    %294 = vmatprep.subr.bf16.mxu0 0
    %295 = vmatpush1.bf16.msra.mxu0 0
    %296 = vmatprep.subr.bf16.mxu0 0
    %297 = vmatpush1.bf16.msra.mxu0 0
    %298 = vmatprep.subr.bf16.mxu0 0
    %299 = vmatpush1.bf16.msra.mxu0 0
    %300 = vmatprep.subr.bf16.mxu0 0
    %301 = vmatpush1.bf16.msra.mxu0 0
    %302 = vmatprep.subr.bf16.mxu0 0
    %303 = vmatpush1.bf16.msra.mxu0 0
    %304 = vmatprep.subr.bf16.mxu0 0
    %305 = vmatpush1.bf16.msra.mxu0 0
    %306 = vmatprep.mubr.bf16.mxu0 0
    %307 = vmatmul.mubr.bf16.gmra.mrb[0].mxu0 %v227
    %v308 = vpop.f32.mrb[0].mxu0
    %v309 = vadd.f32 %v88, %v308
    %v310 = vpop.f32.mrb[0].mxu0
    %v311 = vadd.f32 %v92, %v310
    %v312 = vpop.f32.mrb[0].mxu0
    %v313 = vadd.f32 %v88, %v312
    %v314 = vpop.f32.mrb[0].mxu0
    %v315 = vadd.f32 %v92, %v314
    %316 = vmatprep.mubr.bf16.mxu0 0
    %317 = vmatmul.mubr.bf16.gmra.mrb[0].mxu0 %v230
    %v318 = vpop.f32.mrb[0].mxu0
    %v319 = vadd.f32 %v88, %v318
    %v320 = vpop.f32.mrb[0].mxu0
    %v321 = vadd.f32 %v92, %v320
    %v322 = vpop.f32.mrb[0].mxu0
    %v323 = vadd.f32 %v88, %v322
    %v324 = vpop.f32.mrb[0].mxu0
    %v325 = vadd.f32 %v92, %v324
    %326 = vmatprep.mubr.bf16.mxu0 0
    %327 = vmatmul.mubr.bf16.gmra.mrb[0].mxu0 %v233
    %v328 = vpop.f32.mrb[0].mxu0
    %v329 = vadd.f32 %v88, %v328
    %v330 = vpop.f32.mrb[0].mxu0
    %v331 = vadd.f32 %v92, %v330
    %v332 = vpop.f32.mrb[0].mxu0
    %v333 = vadd.f32 %v88, %v332
    %v334 = vpop.f32.mrb[0].mxu0
    %v335 = vadd.f32 %v92, %v334
    %336 = vmatprep.mubr.bf16.mxu0 0
    %337 = vmatmul.mubr.bf16.gmra.mrb[0].mxu0 %v236
    %v338 = vpop.f32.mrb[0].mxu0
    %v339 = vadd.f32 %v88, %v338
    %v340 = vpop.f32.mrb[0].mxu0
    %v341 = vadd.f32 %v92, %v340
    %v342 = vpop.f32.mrb[0].mxu0
    %v343 = vadd.f32 %v88, %v342
    %v344 = vpop.f32.mrb[0].mxu0
    %v345 = vadd.f32 %v92, %v344
    %346 = vmatprep.mubr.bf16.mxu0 0
    %347 = vmatmul.mubr.bf16.gmra.mrb[0].mxu0 %v239
    %v348 = vpop.f32.mrb[0].mxu0
    %v349 = vadd.f32 %v88, %v348
    %v350 = vpop.f32.mrb[0].mxu0
    %v351 = vadd.f32 %v92, %v350
    %v352 = vpop.f32.mrb[0].mxu0
    %v353 = vadd.f32 %v88, %v352
    %v354 = vpop.f32.mrb[0].mxu0
    %v355 = vadd.f32 %v92, %v354
    %356 = vmatprep.mubr.bf16.mxu0 0
    %357 = vmatmul.mubr.bf16.gmra.mrb[0].mxu0 %v242
    %v358 = vpop.f32.mrb[0].mxu0
    %v359 = vadd.f32 %v88, %v358
    %v360 = vpop.f32.mrb[0].mxu0
    %v361 = vadd.f32 %v92, %v360
    %v362 = vpop.f32.mrb[0].mxu0
    %v363 = vadd.f32 %v88, %v362
    %v364 = vpop.f32.mrb[0].mxu0
    %v365 = vadd.f32 %v92, %v364
    %366 = vmatprep.mubr.bf16.mxu0 0
    %367 = vmatmul.mubr.bf16.gmra.mrb[0].mxu0 %v245
    %v368 = vpop.f32.mrb[0].mxu0
    %v369 = vadd.f32 %v88, %v368
    %v370 = vpop.f32.mrb[0].mxu0
    %v371 = vadd.f32 %v92, %v370
    %v372 = vpop.f32.mrb[0].mxu0
    %v373 = vadd.f32 %v88, %v372
    %v374 = vpop.f32.mrb[0].mxu0
    %v375 = vadd.f32 %v92, %v374
    %376 = vmatprep.mubr.bf16.mxu0 0
    %377 = vmatmul.mubr.bf16.gmra.mrb[0].mxu0 %v248
    %v378 = vpop.f32.mrb[0].mxu0
    %v379 = vadd.f32 %v88, %v378
    %v380 = vpop.f32.mrb[0].mxu0
    %v381 = vadd.f32 %v92, %v380
    %v382 = vpop.f32.mrb[0].mxu0
    %v383 = vadd.f32 %v88, %v382
    %v384 = vpop.f32.mrb[0].mxu0
    %v385 = vadd.f32 %v92, %v384
    %386 = vmatprep.mubr.bf16.mxu0 0
    %387 = vmatmul.mubr.bf16.gmra.mrb[0].mxu0 %v251
    %v388 = vpop.f32.mrb[0].mxu0
    %v389 = vadd.f32 %v88, %v388
    %v390 = vpop.f32.mrb[0].mxu0
    %v391 = vadd.f32 %v92, %v390
    %v392 = vpop.f32.mrb[0].mxu0
    %v393 = vadd.f32 %v88, %v392
    %v394 = vpop.f32.mrb[0].mxu0
    %v395 = vadd.f32 %v92, %v394
    %396 = vmatprep.mubr.bf16.mxu0 0
    %397 = vmatmul.mubr.bf16.gmra.mrb[0].mxu0 %v254
    %v398 = vpop.f32.mrb[0].mxu0
    %v399 = vadd.f32 %v88, %v398
    %v400 = vpop.f32.mrb[0].mxu0
    %v401 = vadd.f32 %v92, %v400
    %v402 = vpop.f32.mrb[0].mxu0
    %v403 = vadd.f32 %v88, %v402
    %v404 = vpop.f32.mrb[0].mxu0
    %v405 = vadd.f32 %v92, %v404
    %406 = vmatprep.mubr.bf16.mxu0 0
    %407 = vmatmul.mubr.bf16.gmra.mrb[0].mxu0 %v257
    %v408 = vpop.f32.mrb[0].mxu0
    %v409 = vadd.f32 %v88, %v408
    %v410 = vpop.f32.mrb[0].mxu0
    %v411 = vadd.f32 %v92, %v410
    %v412 = vpop.f32.mrb[0].mxu0
    %v413 = vadd.f32 %v88, %v412
    %v414 = vpop.f32.mrb[0].mxu0
    %v415 = vadd.f32 %v92, %v414
    %416 = vmatprep.mubr.bf16.mxu0 0
    %417 = vmatmul.mubr.bf16.gmra.mrb[0].mxu0 %v260
    %v418 = vpop.f32.mrb[0].mxu0
    %v419 = vadd.f32 %v88, %v418
    %v420 = vpop.f32.mrb[0].mxu0
    %v421 = vadd.f32 %v92, %v420
    %v422 = vpop.f32.mrb[0].mxu0
    %v423 = vadd.f32 %v88, %v422
    %v424 = vpop.f32.mrb[0].mxu0
    %v425 = vadd.f32 %v92, %v424
    %426 = vmatprep.mubr.bf16.mxu0 0
    %427 = vmatmul.mubr.bf16.gmra.mrb[0].mxu0 %v263
    %v428 = vpop.f32.mrb[0].mxu0
    %v429 = vadd.f32 %v88, %v428
    %v430 = vpop.f32.mrb[0].mxu0
    %v431 = vadd.f32 %v92, %v430
    %v432 = vpop.f32.mrb[0].mxu0
    %v433 = vadd.f32 %v88, %v432
    %v434 = vpop.f32.mrb[0].mxu0
    %v435 = vadd.f32 %v92, %v434
    %436 = vmatprep.mubr.bf16.mxu0 0
    %437 = vmatmul.mubr.bf16.gmra.mrb[0].mxu0 %v266
    %v438 = vpop.f32.mrb[0].mxu0
    %v439 = vadd.f32 %v88, %v438
    %v440 = vpop.f32.mrb[0].mxu0
    %v441 = vadd.f32 %v92, %v440
    %v442 = vpop.f32.mrb[0].mxu0
    %v443 = vadd.f32 %v88, %v442
    %v444 = vpop.f32.mrb[0].mxu0
    %v445 = vadd.f32 %v92, %v444
    %446 = vmatprep.mubr.bf16.mxu0 0
    %447 = vmatmul.mubr.bf16.gmra.mrb[0].mxu0 %v269
    %v448 = vpop.f32.mrb[0].mxu0
    %v449 = vadd.f32 %v88, %v448
    %v450 = vpop.f32.mrb[0].mxu0
    %v451 = vadd.f32 %v92, %v450
    %v452 = vpop.f32.mrb[0].mxu0
    %v453 = vadd.f32 %v88, %v452
    %v454 = vpop.f32.mrb[0].mxu0
    %v455 = vadd.f32 %v92, %v454
    %456 = vmatprep.mubr.bf16.mxu0 0
    %457 = vmatmul.mubr.bf16.gmra.mrb[0].mxu0 %v272
    %v458 = vpop.f32.mrb[0].mxu0
    %v459 = vadd.f32 %v88, %v458
    %v460 = vpop.f32.mrb[0].mxu0
    %v461 = vadd.f32 %v92, %v460
    %v462 = vpop.f32.mrb[0].mxu0
    %v463 = vadd.f32 %v88, %v462
    %v464 = vpop.f32.mrb[0].mxu0
    %v465 = vadd.f32 %v92, %v464
    %466 = vdwg.mxu0
    %467 = vmatprep.subr.bf16.mxu0 %v212
    %468 = vmatpush1.bf16.msra.mxu0 %v211
    %469 = vmatprep.subr.bf16.mxu0 %v216
    %470 = vmatpush1.bf16.msra.mxu0 %v215
    %471 = vmatprep.subr.bf16.mxu0 0
    %472 = vmatpush1.bf16.msra.mxu0 0
    %473 = vmatprep.subr.bf16.mxu0 0
    %474 = vmatpush1.bf16.msra.mxu0 0
    %475 = vmatprep.subr.bf16.mxu0 0
    %476 = vmatpush1.bf16.msra.mxu0 0
    %477 = vmatprep.subr.bf16.mxu0 0
    %478 = vmatpush1.bf16.msra.mxu0 0
    %479 = vmatprep.subr.bf16.mxu0 0
    %480 = vmatpush1.bf16.msra.mxu0 0
    %481 = vmatprep.subr.bf16.mxu0 0
    %482 = vmatpush1.bf16.msra.mxu0 0
    %483 = vmatprep.subr.bf16.mxu0 0
    %484 = vmatpush1.bf16.msra.mxu0 0
    %485 = vmatprep.subr.bf16.mxu0 0
    %486 = vmatpush1.bf16.msra.mxu0 0
    %487 = vmatprep.subr.bf16.mxu0 0
    %488 = vmatpush1.bf16.msra.mxu0 0
    %489 = vmatprep.subr.bf16.mxu0 0
    %490 = vmatpush1.bf16.msra.mxu0 0
    %491 = vmatprep.subr.bf16.mxu0 0
    %492 = vmatpush1.bf16.msra.mxu0 0
    %493 = vmatprep.subr.bf16.mxu0 0
    %494 = vmatpush1.bf16.msra.mxu0 0
    %495 = vmatprep.subr.bf16.mxu0 0
    %496 = vmatpush1.bf16.msra.mxu0 0
    %497 = vmatprep.subr.bf16.mxu0 0
    %498 = vmatpush1.bf16.msra.mxu0 0
    %499 = vmatprep.mubr.bf16.mxu0 0
    %500 = vmatmul.mubr.bf16.gmra.mrb[0].mxu0 %v227
    %v501 = vpop.f32.mrb[0].mxu0
    %v502 = vadd.f32 %v96, %v501
    %v503 = vpop.f32.mrb[0].mxu0
    %v504 = vadd.f32 %v100, %v503
    %v505 = vpop.f32.mrb[0].mxu0
    %v506 = vadd.f32 %v96, %v505
    %v507 = vpop.f32.mrb[0].mxu0
    %v508 = vadd.f32 %v100, %v507
    %509 = vmatprep.mubr.bf16.mxu0 0
    %510 = vmatmul.mubr.bf16.gmra.mrb[0].mxu0 %v230
    %v511 = vpop.f32.mrb[0].mxu0
    %v512 = vadd.f32 %v96, %v511
    %v513 = vpop.f32.mrb[0].mxu0
    %v514 = vadd.f32 %v100, %v513
    %v515 = vpop.f32.mrb[0].mxu0
    %v516 = vadd.f32 %v96, %v515
    %v517 = vpop.f32.mrb[0].mxu0
    %v518 = vadd.f32 %v100, %v517
    %519 = vmatprep.mubr.bf16.mxu0 0
    %520 = vmatmul.mubr.bf16.gmra.mrb[0].mxu0 %v233
    %v521 = vpop.f32.mrb[0].mxu0
    %v522 = vadd.f32 %v96, %v521
    %v523 = vpop.f32.mrb[0].mxu0
    %v524 = vadd.f32 %v100, %v523
    %v525 = vpop.f32.mrb[0].mxu0
    %v526 = vadd.f32 %v96, %v525
    %v527 = vpop.f32.mrb[0].mxu0
    %v528 = vadd.f32 %v100, %v527
    %529 = vmatprep.mubr.bf16.mxu0 0
    %530 = vmatmul.mubr.bf16.gmra.mrb[0].mxu0 %v236
    %v531 = vpop.f32.mrb[0].mxu0
    %v532 = vadd.f32 %v96, %v531
    %v533 = vpop.f32.mrb[0].mxu0
    %v534 = vadd.f32 %v100, %v533
    %v535 = vpop.f32.mrb[0].mxu0
    %v536 = vadd.f32 %v96, %v535
    %v537 = vpop.f32.mrb[0].mxu0
    %v538 = vadd.f32 %v100, %v537
    %539 = vmatprep.mubr.bf16.mxu0 0
    %540 = vmatmul.mubr.bf16.gmra.mrb[0].mxu0 %v239
    %v541 = vpop.f32.mrb[0].mxu0
    %v542 = vadd.f32 %v96, %v541
    %v543 = vpop.f32.mrb[0].mxu0
    %v544 = vadd.f32 %v100, %v543
    %v545 = vpop.f32.mrb[0].mxu0
    %v546 = vadd.f32 %v96, %v545
    %v547 = vpop.f32.mrb[0].mxu0
    %v548 = vadd.f32 %v100, %v547
    %549 = vmatprep.mubr.bf16.mxu0 0
    %550 = vmatmul.mubr.bf16.gmra.mrb[0].mxu0 %v242
    %v551 = vpop.f32.mrb[0].mxu0
    %v552 = vadd.f32 %v96, %v551
    %v553 = vpop.f32.mrb[0].mxu0
    %v554 = vadd.f32 %v100, %v553
    %v555 = vpop.f32.mrb[0].mxu0
    %v556 = vadd.f32 %v96, %v555
    %v557 = vpop.f32.mrb[0].mxu0
    %v558 = vadd.f32 %v100, %v557
    %559 = vmatprep.mubr.bf16.mxu0 0
    %560 = vmatmul.mubr.bf16.gmra.mrb[0].mxu0 %v245
    %v561 = vpop.f32.mrb[0].mxu0
    %v562 = vadd.f32 %v96, %v561
    %v563 = vpop.f32.mrb[0].mxu0
    %v564 = vadd.f32 %v100, %v563
    %v565 = vpop.f32.mrb[0].mxu0
    %v566 = vadd.f32 %v96, %v565
    %v567 = vpop.f32.mrb[0].mxu0
    %v568 = vadd.f32 %v100, %v567
    %569 = vmatprep.mubr.bf16.mxu0 0
    %570 = vmatmul.mubr.bf16.gmra.mrb[0].mxu0 %v248
    %v571 = vpop.f32.mrb[0].mxu0
    %v572 = vadd.f32 %v96, %v571
    %v573 = vpop.f32.mrb[0].mxu0
    %v574 = vadd.f32 %v100, %v573
    %v575 = vpop.f32.mrb[0].mxu0
    %v576 = vadd.f32 %v96, %v575
    %v577 = vpop.f32.mrb[0].mxu0
    %v578 = vadd.f32 %v100, %v577
    %579 = vmatprep.mubr.bf16.mxu0 0
    %580 = vmatmul.mubr.bf16.gmra.mrb[0].mxu0 %v251
    %v581 = vpop.f32.mrb[0].mxu0
    %v582 = vadd.f32 %v96, %v581
    %v583 = vpop.f32.mrb[0].mxu0
    %v584 = vadd.f32 %v100, %v583
    %v585 = vpop.f32.mrb[0].mxu0
    %v586 = vadd.f32 %v96, %v585
    %v587 = vpop.f32.mrb[0].mxu0
    %v588 = vadd.f32 %v100, %v587
    %589 = vmatprep.mubr.bf16.mxu0 0
    %590 = vmatmul.mubr.bf16.gmra.mrb[0].mxu0 %v254
    %v591 = vpop.f32.mrb[0].mxu0
    %v592 = vadd.f32 %v96, %v591
    %v593 = vpop.f32.mrb[0].mxu0
    %v594 = vadd.f32 %v100, %v593
    %v595 = vpop.f32.mrb[0].mxu0
    %v596 = vadd.f32 %v96, %v595
    %v597 = vpop.f32.mrb[0].mxu0
    %v598 = vadd.f32 %v100, %v597
    %599 = vmatprep.mubr.bf16.mxu0 0
    %600 = vmatmul.mubr.bf16.gmra.mrb[0].mxu0 %v257
    %v601 = vpop.f32.mrb[0].mxu0
    %v602 = vadd.f32 %v96, %v601
    %v603 = vpop.f32.mrb[0].mxu0
    %v604 = vadd.f32 %v100, %v603
    %v605 = vpop.f32.mrb[0].mxu0
    %v606 = vadd.f32 %v96, %v605
    %v607 = vpop.f32.mrb[0].mxu0
    %v608 = vadd.f32 %v100, %v607
    %609 = vmatprep.mubr.bf16.mxu0 0
    %610 = vmatmul.mubr.bf16.gmra.mrb[0].mxu0 %v260
    %v611 = vpop.f32.mrb[0].mxu0
    %v612 = vadd.f32 %v96, %v611
    %v613 = vpop.f32.mrb[0].mxu0
    %v614 = vadd.f32 %v100, %v613
    %v615 = vpop.f32.mrb[0].mxu0
    %v616 = vadd.f32 %v96, %v615
    %v617 = vpop.f32.mrb[0].mxu0
    %v618 = vadd.f32 %v100, %v617
    %619 = vmatprep.mubr.bf16.mxu0 0
    %620 = vmatmul.mubr.bf16.gmra.mrb[0].mxu0 %v263
    %v621 = vpop.f32.mrb[0].mxu0
    %v622 = vadd.f32 %v96, %v621
    %v623 = vpop.f32.mrb[0].mxu0
    %v624 = vadd.f32 %v100, %v623
    %v625 = vpop.f32.mrb[0].mxu0
    %v626 = vadd.f32 %v96, %v625
    %v627 = vpop.f32.mrb[0].mxu0
    %v628 = vadd.f32 %v100, %v627
    %629 = vmatprep.mubr.bf16.mxu0 0
    %630 = vmatmul.mubr.bf16.gmra.mrb[0].mxu0 %v266
    %v631 = vpop.f32.mrb[0].mxu0
    %v632 = vadd.f32 %v96, %v631
    %v633 = vpop.f32.mrb[0].mxu0
    %v634 = vadd.f32 %v100, %v633
    %v635 = vpop.f32.mrb[0].mxu0
    %v636 = vadd.f32 %v96, %v635
    %v637 = vpop.f32.mrb[0].mxu0
    %v638 = vadd.f32 %v100, %v637
    %639 = vmatprep.mubr.bf16.mxu0 0
    %640 = vmatmul.mubr.bf16.gmra.mrb[0].mxu0 %v269
    %v641 = vpop.f32.mrb[0].mxu0
    %v642 = vadd.f32 %v96, %v641
    %v643 = vpop.f32.mrb[0].mxu0
    %v644 = vadd.f32 %v100, %v643
    %v645 = vpop.f32.mrb[0].mxu0
    %v646 = vadd.f32 %v96, %v645
    %v647 = vpop.f32.mrb[0].mxu0
    %v648 = vadd.f32 %v100, %v647
    %649 = vmatprep.mubr.bf16.mxu0 0
    %650 = vmatmul.mubr.bf16.gmra.mrb[0].mxu0 %v272
    %v651 = vpop.f32.mrb[0].mxu0
    %v652 = vadd.f32 %v96, %v651
    %v653 = vpop.f32.mrb[0].mxu0
    %v654 = vadd.f32 %v100, %v653
    %v655 = vpop.f32.mrb[0].mxu0
    %v656 = vadd.f32 %v96, %v655
    %v657 = vpop.f32.mrb[0].mxu0
    %v658 = vadd.f32 %v100, %v657
    %659 = vdwg.mxu0
    %v660 = vmax.f32 %v309, 0.0
    %v661 = vmax.f32 %v311, 0.0
    %v662 = vmax.f32 %v502, 0.0
    %v663 = vmax.f32 %v504, 0.0
    %v664 = vmax.f32 %v313, 0.0
    %v665 = vmax.f32 %v315, 0.0
    %v666 = vmax.f32 %v506, 0.0
    %v667 = vmax.f32 %v508, 0.0
    %v668 = vmax.f32 %v319, 0.0
    %v669 = vmax.f32 %v321, 0.0
    %v670 = vmax.f32 %v512, 0.0
    %v671 = vmax.f32 %v514, 0.0
    %v672 = vmax.f32 %v323, 0.0
    %v673 = vmax.f32 %v325, 0.0
    %v674 = vmax.f32 %v516, 0.0
    %v675 = vmax.f32 %v518, 0.0
    %v676 = vmax.f32 %v329, 0.0
    %v677 = vmax.f32 %v331, 0.0
    %v678 = vmax.f32 %v522, 0.0
    %v679 = vmax.f32 %v524, 0.0
    %v680 = vmax.f32 %v333, 0.0
    %v681 = vmax.f32 %v335, 0.0
    %v682 = vmax.f32 %v526, 0.0
    %v683 = vmax.f32 %v528, 0.0
    %v684 = vmax.f32 %v339, 0.0
    %v685 = vmax.f32 %v341, 0.0
    %v686 = vmax.f32 %v532, 0.0
    %v687 = vmax.f32 %v534, 0.0
    %v688 = vmax.f32 %v343, 0.0
    %v689 = vmax.f32 %v345, 0.0
    %v690 = vmax.f32 %v536, 0.0
    %v691 = vmax.f32 %v538, 0.0
    %v692 = vmax.f32 %v349, 0.0
    %v693 = vmax.f32 %v351, 0.0
    %v694 = vmax.f32 %v542, 0.0
    %v695 = vmax.f32 %v544, 0.0
    %v696 = vmax.f32 %v353, 0.0
    %v697 = vmax.f32 %v355, 0.0
    %v698 = vmax.f32 %v546, 0.0
    %v699 = vmax.f32 %v548, 0.0
    %v700 = vmax.f32 %v359, 0.0
    %v701 = vmax.f32 %v361, 0.0
    %v702 = vmax.f32 %v552, 0.0
    %v703 = vmax.f32 %v554, 0.0
    %v704 = vmax.f32 %v363, 0.0
    %v705 = vmax.f32 %v365, 0.0
    %v706 = vmax.f32 %v556, 0.0
    %v707 = vmax.f32 %v558, 0.0
    %v708 = vmax.f32 %v369, 0.0
    %v709 = vmax.f32 %v371, 0.0
    %v710 = vmax.f32 %v562, 0.0
    %v711 = vmax.f32 %v564, 0.0
    %v712 = vmax.f32 %v373, 0.0
    %v713 = vmax.f32 %v375, 0.0
    %v714 = vmax.f32 %v566, 0.0
    %v715 = vmax.f32 %v568, 0.0
    %v716 = vmax.f32 %v379, 0.0
    %v717 = vmax.f32 %v381, 0.0
    %v718 = vmax.f32 %v572, 0.0
    %v719 = vmax.f32 %v574, 0.0
    %v720 = vmax.f32 %v383, 0.0
    %v721 = vmax.f32 %v385, 0.0
    %v722 = vmax.f32 %v576, 0.0
    %v723 = vmax.f32 %v578, 0.0
    %v724 = vmax.f32 %v389, 0.0
    %v725 = vmax.f32 %v391, 0.0
    %v726 = vmax.f32 %v582, 0.0
    %v727 = vmax.f32 %v584, 0.0
    %v728 = vmax.f32 %v393, 0.0
    %v729 = vmax.f32 %v395, 0.0
    %v730 = vmax.f32 %v586, 0.0
    %v731 = vmax.f32 %v588, 0.0
    %v732 = vmax.f32 %v399, 0.0
    %v733 = vmax.f32 %v401, 0.0
    %v734 = vmax.f32 %v592, 0.0
    %v735 = vmax.f32 %v594, 0.0
    %v736 = vmax.f32 %v403, 0.0
    %v737 = vmax.f32 %v405, 0.0
    %v738 = vmax.f32 %v596, 0.0
    %v739 = vmax.f32 %v598, 0.0
    %v740 = vmax.f32 %v409, 0.0
    %v741 = vmax.f32 %v411, 0.0
    %v742 = vmax.f32 %v602, 0.0
    %v743 = vmax.f32 %v604, 0.0
    %v744 = vmax.f32 %v413, 0.0
    %v745 = vmax.f32 %v415, 0.0
    %v746 = vmax.f32 %v606, 0.0
    %v747 = vmax.f32 %v608, 0.0
    %v748 = vmax.f32 %v419, 0.0
    %v749 = vmax.f32 %v421, 0.0
    %v750 = vmax.f32 %v612, 0.0
    %v751 = vmax.f32 %v614, 0.0
    %v752 = vmax.f32 %v423, 0.0
    %v753 = vmax.f32 %v425, 0.0
    %v754 = vmax.f32 %v616, 0.0
    %v755 = vmax.f32 %v618, 0.0
    %v756 = vmax.f32 %v429, 0.0
    %v757 = vmax.f32 %v431, 0.0
    %v758 = vmax.f32 %v622, 0.0
    %v759 = vmax.f32 %v624, 0.0
    %v760 = vmax.f32 %v433, 0.0
    %v761 = vmax.f32 %v435, 0.0
    %v762 = vmax.f32 %v626, 0.0
    %v763 = vmax.f32 %v628, 0.0
    %v764 = vmax.f32 %v439, 0.0
    %v765 = vmax.f32 %v441, 0.0
    %v766 = vmax.f32 %v632, 0.0
    %v767 = vmax.f32 %v634, 0.0
    %v768 = vmax.f32 %v443, 0.0
    %v769 = vmax.f32 %v445, 0.0
    %v770 = vmax.f32 %v636, 0.0
    %v771 = vmax.f32 %v638, 0.0
    %v772 = vmax.f32 %v449, 0.0
    %v773 = vmax.f32 %v451, 0.0
    %v774 = vmax.f32 %v642, 0.0
    %v775 = vmax.f32 %v644, 0.0
    %v776 = vmax.f32 %v453, 0.0
    %v777 = vmax.f32 %v455, 0.0
    %v778 = vmax.f32 %v646, 0.0
    %v779 = vmax.f32 %v648, 0.0
    %v780 = vmax.f32 %v459, 0.0
    %v781 = vmax.f32 %v461, 0.0
    %v782 = vmax.f32 %v652, 0.0
    %v783 = vmax.f32 %v654, 0.0
    %v784 = vmax.f32 %v463, 0.0
    %v785 = vmax.f32 %v465, 0.0
    %v786 = vmax.f32 %v656, 0.0
    %v787 = vmax.f32 %v658, 0.0
    %v788 = vpack.c.bf16 %v664, %v660
    %v789 = vpack.c.bf16 %v665, %v661
    %v790 = vpack.c.bf16 %v666, %v662
    %v791 = vpack.c.bf16 %v667, %v663
    %v792 = vpack.c.bf16 %v672, %v668
    %v793 = vpack.c.bf16 %v673, %v669
    %v794 = vpack.c.bf16 %v674, %v670
    %v795 = vpack.c.bf16 %v675, %v671
    %v796 = vpack.c.bf16 %v680, %v676
    %v797 = vpack.c.bf16 %v681, %v677
    %v798 = vpack.c.bf16 %v682, %v678
    %v799 = vpack.c.bf16 %v683, %v679
    %v800 = vpack.c.bf16 %v688, %v684
    %v801 = vpack.c.bf16 %v689, %v685
    %v802 = vpack.c.bf16 %v690, %v686
    %v803 = vpack.c.bf16 %v691, %v687
    %v804 = vpack.c.bf16 %v696, %v692
    %v805 = vpack.c.bf16 %v697, %v693
    %v806 = vpack.c.bf16 %v698, %v694
    %v807 = vpack.c.bf16 %v699, %v695
    %v808 = vpack.c.bf16 %v704, %v700
    %v809 = vpack.c.bf16 %v705, %v701
    %v810 = vpack.c.bf16 %v706, %v702
    %v811 = vpack.c.bf16 %v707, %v703
    %v812 = vpack.c.bf16 %v712, %v708
    %v813 = vpack.c.bf16 %v713, %v709
    %v814 = vpack.c.bf16 %v714, %v710
    %v815 = vpack.c.bf16 %v715, %v711
    %v816 = vpack.c.bf16 %v720, %v716
    %v817 = vpack.c.bf16 %v721, %v717
    %v818 = vpack.c.bf16 %v722, %v718
    %v819 = vpack.c.bf16 %v723, %v719
    %v820 = vpack.c.bf16 %v728, %v724
    %v821 = vpack.c.bf16 %v729, %v725
    %v822 = vpack.c.bf16 %v730, %v726
    %v823 = vpack.c.bf16 %v731, %v727
    %v824 = vpack.c.bf16 %v736, %v732
    %v825 = vpack.c.bf16 %v737, %v733
    %v826 = vpack.c.bf16 %v738, %v734
    %v827 = vpack.c.bf16 %v739, %v735
    %v828 = vpack.c.bf16 %v744, %v740
    %v829 = vpack.c.bf16 %v745, %v741
    %v830 = vpack.c.bf16 %v746, %v742
    %v831 = vpack.c.bf16 %v747, %v743
    %v832 = vpack.c.bf16 %v752, %v748
    %v833 = vpack.c.bf16 %v753, %v749
    %v834 = vpack.c.bf16 %v754, %v750
    %v835 = vpack.c.bf16 %v755, %v751
    %v836 = vpack.c.bf16 %v760, %v756
    %v837 = vpack.c.bf16 %v761, %v757
    %v838 = vpack.c.bf16 %v762, %v758
    %v839 = vpack.c.bf16 %v763, %v759
    %v840 = vpack.c.bf16 %v768, %v764
    %v841 = vpack.c.bf16 %v769, %v765
    %v842 = vpack.c.bf16 %v770, %v766
    %v843 = vpack.c.bf16 %v771, %v767
    %v844 = vpack.c.bf16 %v776, %v772
    %v845 = vpack.c.bf16 %v777, %v773
    %v846 = vpack.c.bf16 %v778, %v774
    %v847 = vpack.c.bf16 %v779, %v775
    %v848 = vpack.c.bf16 %v784, %v780
    %v849 = vpack.c.bf16 %v785, %v781
    %v850 = vpack.c.bf16 %v786, %v782
    %v851 = vpack.c.bf16 %v787, %v783
    %v852 = vld [vmem:[#allocation3] sm:$0xff]
    %v853 = vld [vmem:[#allocation3 + $0x8] sm:$0xff]
    %v854 = vld [vmem:[#allocation3 + $0x10] sm:$0xff]
    %v855 = vld [vmem:[#allocation3 + $0x18] sm:$0xff]
    %v856 = vld [vmem:[#allocation3 + $0x20] sm:$0xff]
    %v857 = vld [vmem:[#allocation3 + $0x28] sm:$0xff]
    %v858 = vld [vmem:[#allocation3 + $0x30] sm:$0xff]
    %v859 = vld [vmem:[#allocation3 + $0x38] sm:$0xff]
    %v860 = vld [vmem:[#allocation3 + $0x40] sm:$0xff]
    %v861 = vld [vmem:[#allocation3 + $0x48] sm:$0xff]
    %v862 = vld [vmem:[#allocation3 + $0x50] sm:$0xff]
    %v863 = vld [vmem:[#allocation3 + $0x58] sm:$0xff]
    %v864 = vld [vmem:[#allocation3 + $0x60] sm:$0xff]
    %v865 = vld [vmem:[#allocation3 + $0x68] sm:$0xff]
    %v866 = vld [vmem:[#allocation3 + $0x70] sm:$0xff]
    %v867 = vld [vmem:[#allocation3 + $0x78] sm:$0xff]
    %v868 = vld [vmem:[#allocation3 + $0x80] sm:$0xff]
    %v869 = vld [vmem:[#allocation3 + $0x88] sm:$0xff]
    %v870 = vld [vmem:[#allocation3 + $0x90] sm:$0xff]
    %v871 = vld [vmem:[#allocation3 + $0x98] sm:$0xff]
    %v872 = vld [vmem:[#allocation3 + $0xa0] sm:$0xff]
    %v873 = vld [vmem:[#allocation3 + $0xa8] sm:$0xff]
    %v874 = vld [vmem:[#allocation3 + $0xb0] sm:$0xff]
    %v875 = vld [vmem:[#allocation3 + $0xb8] sm:$0xff]
    %v876 = vld [vmem:[#allocation3 + $0xc0] sm:$0xff]
    %v877 = vld [vmem:[#allocation3 + $0xc8] sm:$0xff]
    %v878 = vld [vmem:[#allocation3 + $0xd0] sm:$0xff]
    %v879 = vld [vmem:[#allocation3 + $0xd8] sm:$0xff]
    %v880 = vld [vmem:[#allocation3 + $0xe0] sm:$0xff]
    %v881 = vld [vmem:[#allocation3 + $0xe8] sm:$0xff]
    %v882 = vld [vmem:[#allocation3 + $0xf0] sm:$0xff]
    %v883 = vld [vmem:[#allocation3 + $0xf8] sm:$0xff]
    %v884 = vld [vmem:[#allocation3 + $0x100] sm:$0xff]
    %v885 = vld [vmem:[#allocation3 + $0x108] sm:$0xff]
    %v886 = vld [vmem:[#allocation3 + $0x110] sm:$0xff]
    %v887 = vld [vmem:[#allocation3 + $0x118] sm:$0xff]
    %v888 = vld [vmem:[#allocation3 + $0x120] sm:$0xff]
    %v889 = vld [vmem:[#allocation3 + $0x128] sm:$0xff]
    %v890 = vld [vmem:[#allocation3 + $0x130] sm:$0xff]
    %v891 = vld [vmem:[#allocation3 + $0x138] sm:$0xff]
    %v892 = vld [vmem:[#allocation3 + $0x140] sm:$0xff]
    %v893 = vld [vmem:[#allocation3 + $0x148] sm:$0xff]
    %v894 = vld [vmem:[#allocation3 + $0x150] sm:$0xff]
    %v895 = vld [vmem:[#allocation3 + $0x158] sm:$0xff]
    %v896 = vld [vmem:[#allocation3 + $0x160] sm:$0xff]
    %v897 = vld [vmem:[#allocation3 + $0x168] sm:$0xff]
    %v898 = vld [vmem:[#allocation3 + $0x170] sm:$0xff]
    %v899 = vld [vmem:[#allocation3 + $0x178] sm:$0xff]
    %v900 = vld [vmem:[#allocation3 + $0x180] sm:$0xff]
    %v901 = vld [vmem:[#allocation3 + $0x188] sm:$0xff]
    %v902 = vld [vmem:[#allocation3 + $0x190] sm:$0xff]
    %v903 = vld [vmem:[#allocation3 + $0x198] sm:$0xff]
    %v904 = vld [vmem:[#allocation3 + $0x1a0] sm:$0xff]
    %v905 = vld [vmem:[#allocation3 + $0x1a8] sm:$0xff]
    %v906 = vld [vmem:[#allocation3 + $0x1b0] sm:$0xff]
    %v907 = vld [vmem:[#allocation3 + $0x1b8] sm:$0xff]
    %v908 = vld [vmem:[#allocation3 + $0x1c0] sm:$0xff]
    %v909 = vld [vmem:[#allocation3 + $0x1c8] sm:$0xff]
    %v910 = vld [vmem:[#allocation3 + $0x1d0] sm:$0xff]
    %v911 = vld [vmem:[#allocation3 + $0x1d8] sm:$0xff]
    %v912 = vld [vmem:[#allocation3 + $0x1e0] sm:$0xff]
    %v913 = vld [vmem:[#allocation3 + $0x1e8] sm:$0xff]
    %v914 = vld [vmem:[#allocation3 + $0x1f0] sm:$0xff]
    %v915 = vld [vmem:[#allocation3 + $0x1f8] sm:$0xff]
    %v916 = vld [vmem:[#allocation3 + $0x200] sm:$0xff]
    %v917 = vld [vmem:[#allocation3 + $0x208] sm:$0xff]
    %v918 = vld [vmem:[#allocation3 + $0x210] sm:$0xff]
    %v919 = vld [vmem:[#allocation3 + $0x218] sm:$0xff]
    %v920 = vld [vmem:[#allocation3 + $0x220] sm:$0xff]
    %v921 = vld [vmem:[#allocation3 + $0x228] sm:$0xff]
    %v922 = vld [vmem:[#allocation3 + $0x230] sm:$0xff]
    %v923 = vld [vmem:[#allocation3 + $0x238] sm:$0xff]
    %v924 = vld [vmem:[#allocation3 + $0x240] sm:$0xff]
    %v925 = vld [vmem:[#allocation3 + $0x248] sm:$0xff]
    %v926 = vld [vmem:[#allocation3 + $0x250] sm:$0xff]
    %v927 = vld [vmem:[#allocation3 + $0x258] sm:$0xff]
    %v928 = vld [vmem:[#allocation3 + $0x260] sm:$0xff]
    %v929 = vld [vmem:[#allocation3 + $0x268] sm:$0xff]
    %v930 = vld [vmem:[#allocation3 + $0x270] sm:$0xff]
    %v931 = vld [vmem:[#allocation3 + $0x278] sm:$0xff]
    %v932 = vld [vmem:[#allocation3 + $0x280] sm:$0xff]
    %v933 = vld [vmem:[#allocation3 + $0x288] sm:$0xff]
    %v934 = vld [vmem:[#allocation3 + $0x290] sm:$0xff]
    %v935 = vld [vmem:[#allocation3 + $0x298] sm:$0xff]
    %v936 = vld [vmem:[#allocation3 + $0x2a0] sm:$0xff]
    %v937 = vld [vmem:[#allocation3 + $0x2a8] sm:$0xff]
    %v938 = vld [vmem:[#allocation3 + $0x2b0] sm:$0xff]
    %v939 = vld [vmem:[#allocation3 + $0x2b8] sm:$0xff]
    %v940 = vld [vmem:[#allocation3 + $0x2c0] sm:$0xff]
    %v941 = vld [vmem:[#allocation3 + $0x2c8] sm:$0xff]
    %v942 = vld [vmem:[#allocation3 + $0x2d0] sm:$0xff]
    %v943 = vld [vmem:[#allocation3 + $0x2d8] sm:$0xff]
    %v944 = vld [vmem:[#allocation3 + $0x2e0] sm:$0xff]
    %v945 = vld [vmem:[#allocation3 + $0x2e8] sm:$0xff]
    %v946 = vld [vmem:[#allocation3 + $0x2f0] sm:$0xff]
    %v947 = vld [vmem:[#allocation3 + $0x2f8] sm:$0xff]
    %v948 = vld [vmem:[#allocation3 + $0x300] sm:$0xff]
    %v949 = vld [vmem:[#allocation3 + $0x308] sm:$0xff]
    %v950 = vld [vmem:[#allocation3 + $0x310] sm:$0xff]
    %v951 = vld [vmem:[#allocation3 + $0x318] sm:$0xff]
    %v952 = vld [vmem:[#allocation3 + $0x320] sm:$0xff]
    %v953 = vld [vmem:[#allocation3 + $0x328] sm:$0xff]
    %v954 = vld [vmem:[#allocation3 + $0x330] sm:$0xff]
    %v955 = vld [vmem:[#allocation3 + $0x338] sm:$0xff]
    %v956 = vld [vmem:[#allocation3 + $0x340] sm:$0xff]
    %v957 = vld [vmem:[#allocation3 + $0x348] sm:$0xff]
    %v958 = vld [vmem:[#allocation3 + $0x350] sm:$0xff]
    %v959 = vld [vmem:[#allocation3 + $0x358] sm:$0xff]
    %v960 = vld [vmem:[#allocation3 + $0x360] sm:$0xff]
    %v961 = vld [vmem:[#allocation3 + $0x368] sm:$0xff]
    %v962 = vld [vmem:[#allocation3 + $0x370] sm:$0xff]
    %v963 = vld [vmem:[#allocation3 + $0x378] sm:$0xff]
    %v964 = vld [vmem:[#allocation3 + $0x380] sm:$0xff]
    %v965 = vld [vmem:[#allocation3 + $0x388] sm:$0xff]
    %v966 = vld [vmem:[#allocation3 + $0x390] sm:$0xff]
    %v967 = vld [vmem:[#allocation3 + $0x398] sm:$0xff]
    %v968 = vld [vmem:[#allocation3 + $0x3a0] sm:$0xff]
    %v969 = vld [vmem:[#allocation3 + $0x3a8] sm:$0xff]
    %v970 = vld [vmem:[#allocation3 + $0x3b0] sm:$0xff]
    %v971 = vld [vmem:[#allocation3 + $0x3b8] sm:$0xff]
    %v972 = vld [vmem:[#allocation3 + $0x3c0] sm:$0xff]
    %v973 = vld [vmem:[#allocation3 + $0x3c8] sm:$0xff]
    %v974 = vld [vmem:[#allocation3 + $0x3d0] sm:$0xff]
    %v975 = vld [vmem:[#allocation3 + $0x3d8] sm:$0xff]
    %v976 = vld [vmem:[#allocation3 + $0x3e0] sm:$0xff]
    %v977 = vld [vmem:[#allocation3 + $0x3e8] sm:$0xff]
    %v978 = vld [vmem:[#allocation3 + $0x3f0] sm:$0xff]
    %v979 = vld [vmem:[#allocation3 + $0x3f8] sm:$0xff]
    %v980 = vld [vmem:[%s4] sm:$0xf]
    %v982 = vlaneseq
    %v983 = vshrl.u32 %v982, 7
    %v984 = vsub.s32 0, %v983
    %v985 = vrot.slane %v980, %v984
    %v986 = vlaneseq
    %v987 = vshrl.u32 %v986, 7
    %v988 = vsub.s32 1, %v987
    %v989 = vrot.slane %v980, %v988
    %v990 = vlaneseq
    %v991 = vshrl.u32 %v990, 7
    %v992 = vsub.s32 2, %v991
    %v993 = vrot.slane %v980, %v992
    %v994 = vlaneseq
    %v995 = vshrl.u32 %v994, 7
    %v996 = vsub.s32 3, %v995
    %v997 = vrot.slane %v980, %v996
    %v1130 = vunpack.c.l.b16 %v852
    %v1131 = vunpack.c.h.b16 %v852
    %v1132 = vunpack.c.l.b16 %v853
    %v1133 = vunpack.c.h.b16 %v853
    %v1134 = vunpack.c.l.b16 %v854
    %v1135 = vunpack.c.h.b16 %v854
    %v1136 = vunpack.c.l.b16 %v855
    %v1137 = vunpack.c.h.b16 %v855
    %v1138 = vunpack.c.l.b16 %v856
    %v1139 = vunpack.c.h.b16 %v856
    %v1140 = vunpack.c.l.b16 %v857
    %v1141 = vunpack.c.h.b16 %v857
    %v1142 = vunpack.c.l.b16 %v858
    %v1143 = vunpack.c.h.b16 %v858
    %v1144 = vunpack.c.l.b16 %v859
    %v1145 = vunpack.c.h.b16 %v859
    %v1146 = vunpack.c.l.b16 %v860
    %v1147 = vunpack.c.h.b16 %v860
    %v1148 = vunpack.c.l.b16 %v861
    %v1149 = vunpack.c.h.b16 %v861
    %v1150 = vunpack.c.l.b16 %v862
    %v1151 = vunpack.c.h.b16 %v862
    %v1152 = vunpack.c.l.b16 %v863
    %v1153 = vunpack.c.h.b16 %v863
    %v1154 = vunpack.c.l.b16 %v864
    %v1155 = vunpack.c.h.b16 %v864
    %v1156 = vunpack.c.l.b16 %v865
    %v1157 = vunpack.c.h.b16 %v865
    %v1158 = vunpack.c.l.b16 %v866
    %v1159 = vunpack.c.h.b16 %v866
    %v1160 = vunpack.c.l.b16 %v867
    %v1161 = vunpack.c.h.b16 %v867
    %v1162 = vunpack.c.l.b16 %v868
    %v1163 = vunpack.c.h.b16 %v868
    %v1164 = vunpack.c.l.b16 %v869
    %v1165 = vunpack.c.h.b16 %v869
    %v1166 = vunpack.c.l.b16 %v870
    %v1167 = vunpack.c.h.b16 %v870
    %v1168 = vunpack.c.l.b16 %v871
    %v1169 = vunpack.c.h.b16 %v871
    %v1170 = vunpack.c.l.b16 %v872
    %v1171 = vunpack.c.h.b16 %v872
    %v1172 = vunpack.c.l.b16 %v873
    %v1173 = vunpack.c.h.b16 %v873
    %v1174 = vunpack.c.l.b16 %v874
    %v1175 = vunpack.c.h.b16 %v874
    %v1176 = vunpack.c.l.b16 %v875
    %v1177 = vunpack.c.h.b16 %v875
    %v1178 = vunpack.c.l.b16 %v876
    %v1179 = vunpack.c.h.b16 %v876
    %v1180 = vunpack.c.l.b16 %v877
    %v1181 = vunpack.c.h.b16 %v877
    %v1182 = vunpack.c.l.b16 %v878
    %v1183 = vunpack.c.h.b16 %v878
    %v1184 = vunpack.c.l.b16 %v879
    %v1185 = vunpack.c.h.b16 %v879
    %v1186 = vunpack.c.l.b16 %v880
    %v1187 = vunpack.c.h.b16 %v880
    %v1188 = vunpack.c.l.b16 %v881
    %v1189 = vunpack.c.h.b16 %v881
    %v1190 = vunpack.c.l.b16 %v882
    %v1191 = vunpack.c.h.b16 %v882
    %v1192 = vunpack.c.l.b16 %v883
    %v1193 = vunpack.c.h.b16 %v883
    %v1194 = vunpack.c.l.b16 %v884
    %v1195 = vunpack.c.h.b16 %v884
    %v1196 = vunpack.c.l.b16 %v885
    %v1197 = vunpack.c.h.b16 %v885
    %v1198 = vunpack.c.l.b16 %v886
    %v1199 = vunpack.c.h.b16 %v886
    %v1200 = vunpack.c.l.b16 %v887
    %v1201 = vunpack.c.h.b16 %v887
    %v1202 = vunpack.c.l.b16 %v888
    %v1203 = vunpack.c.h.b16 %v888
    %v1204 = vunpack.c.l.b16 %v889
    %v1205 = vunpack.c.h.b16 %v889
    %v1206 = vunpack.c.l.b16 %v890
    %v1207 = vunpack.c.h.b16 %v890
    %v1208 = vunpack.c.l.b16 %v891
    %v1209 = vunpack.c.h.b16 %v891
    %v1210 = vunpack.c.l.b16 %v892
    %v1211 = vunpack.c.h.b16 %v892
    %v1212 = vunpack.c.l.b16 %v893
    %v1213 = vunpack.c.h.b16 %v893
    %v1214 = vunpack.c.l.b16 %v894
    %v1215 = vunpack.c.h.b16 %v894
    %v1216 = vunpack.c.l.b16 %v895
    %v1217 = vunpack.c.h.b16 %v895
    %v1218 = vunpack.c.l.b16 %v896
    %v1219 = vunpack.c.h.b16 %v896
    %v1220 = vunpack.c.l.b16 %v897
    %v1221 = vunpack.c.h.b16 %v897
    %v1222 = vunpack.c.l.b16 %v898
    %v1223 = vunpack.c.h.b16 %v898
    %v1224 = vunpack.c.l.b16 %v899
    %v1225 = vunpack.c.h.b16 %v899
    %v1226 = vunpack.c.l.b16 %v900
    %v1227 = vunpack.c.h.b16 %v900
    %v1228 = vunpack.c.l.b16 %v901
    %v1229 = vunpack.c.h.b16 %v901
    %v1230 = vunpack.c.l.b16 %v902
    %v1231 = vunpack.c.h.b16 %v902
    %v1232 = vunpack.c.l.b16 %v903
    %v1233 = vunpack.c.h.b16 %v903
    %v1234 = vunpack.c.l.b16 %v904
    %v1235 = vunpack.c.h.b16 %v904
    %v1236 = vunpack.c.l.b16 %v905
    %v1237 = vunpack.c.h.b16 %v905
    %v1238 = vunpack.c.l.b16 %v906
    %v1239 = vunpack.c.h.b16 %v906
    %v1240 = vunpack.c.l.b16 %v907
    %v1241 = vunpack.c.h.b16 %v907
    %v1242 = vunpack.c.l.b16 %v908
    %v1243 = vunpack.c.h.b16 %v908
    %v1244 = vunpack.c.l.b16 %v909
    %v1245 = vunpack.c.h.b16 %v909
    %v1246 = vunpack.c.l.b16 %v910
    %v1247 = vunpack.c.h.b16 %v910
    %v1248 = vunpack.c.l.b16 %v911
    %v1249 = vunpack.c.h.b16 %v911
    %v1250 = vunpack.c.l.b16 %v912
    %v1251 = vunpack.c.h.b16 %v912
    %v1252 = vunpack.c.l.b16 %v913
    %v1253 = vunpack.c.h.b16 %v913
    %v1254 = vunpack.c.l.b16 %v914
    %v1255 = vunpack.c.h.b16 %v914
    %v1256 = vunpack.c.l.b16 %v915
    %v1257 = vunpack.c.h.b16 %v915
    %v1258 = vunpack.c.l.b16 %v916
    %v1259 = vunpack.c.h.b16 %v916
    %v1260 = vunpack.c.l.b16 %v917
    %v1261 = vunpack.c.h.b16 %v917
    %v1262 = vunpack.c.l.b16 %v918
    %v1263 = vunpack.c.h.b16 %v918
    %v1264 = vunpack.c.l.b16 %v919
    %v1265 = vunpack.c.h.b16 %v919
    %v1266 = vunpack.c.l.b16 %v920
    %v1267 = vunpack.c.h.b16 %v920
    %v1268 = vunpack.c.l.b16 %v921
    %v1269 = vunpack.c.h.b16 %v921
    %v1270 = vunpack.c.l.b16 %v922
    %v1271 = vunpack.c.h.b16 %v922
    %v1272 = vunpack.c.l.b16 %v923
    %v1273 = vunpack.c.h.b16 %v923
    %v1274 = vunpack.c.l.b16 %v924
    %v1275 = vunpack.c.h.b16 %v924
    %v1276 = vunpack.c.l.b16 %v925
    %v1277 = vunpack.c.h.b16 %v925
    %v1278 = vunpack.c.l.b16 %v926
    %v1279 = vunpack.c.h.b16 %v926
    %v1280 = vunpack.c.l.b16 %v927
    %v1281 = vunpack.c.h.b16 %v927
    %v1282 = vunpack.c.l.b16 %v928
    %v1283 = vunpack.c.h.b16 %v928
    %v1284 = vunpack.c.l.b16 %v929
    %v1285 = vunpack.c.h.b16 %v929
    %v1286 = vunpack.c.l.b16 %v930
    %v1287 = vunpack.c.h.b16 %v930
    %v1288 = vunpack.c.l.b16 %v931
    %v1289 = vunpack.c.h.b16 %v931
    %v1290 = vunpack.c.l.b16 %v932
    %v1291 = vunpack.c.h.b16 %v932
    %v1292 = vunpack.c.l.b16 %v933
    %v1293 = vunpack.c.h.b16 %v933
    %v1294 = vunpack.c.l.b16 %v934
    %v1295 = vunpack.c.h.b16 %v934
    %v1296 = vunpack.c.l.b16 %v935
    %v1297 = vunpack.c.h.b16 %v935
    %v1298 = vunpack.c.l.b16 %v936
    %v1299 = vunpack.c.h.b16 %v936
    %v1300 = vunpack.c.l.b16 %v937
    %v1301 = vunpack.c.h.b16 %v937
    %v1302 = vunpack.c.l.b16 %v938
    %v1303 = vunpack.c.h.b16 %v938
    %v1304 = vunpack.c.l.b16 %v939
    %v1305 = vunpack.c.h.b16 %v939
    %v1306 = vunpack.c.l.b16 %v940
    %v1307 = vunpack.c.h.b16 %v940
    %v1308 = vunpack.c.l.b16 %v941
    %v1309 = vunpack.c.h.b16 %v941
    %v1310 = vunpack.c.l.b16 %v942
    %v1311 = vunpack.c.h.b16 %v942
    %v1312 = vunpack.c.l.b16 %v943
    %v1313 = vunpack.c.h.b16 %v943
    %v1314 = vunpack.c.l.b16 %v944
    %v1315 = vunpack.c.h.b16 %v944
    %v1316 = vunpack.c.l.b16 %v945
    %v1317 = vunpack.c.h.b16 %v945
    %v1318 = vunpack.c.l.b16 %v946
    %v1319 = vunpack.c.h.b16 %v946
    %v1320 = vunpack.c.l.b16 %v947
    %v1321 = vunpack.c.h.b16 %v947
    %v1322 = vunpack.c.l.b16 %v948
    %v1323 = vunpack.c.h.b16 %v948
    %v1324 = vunpack.c.l.b16 %v949
    %v1325 = vunpack.c.h.b16 %v949
    %v1326 = vunpack.c.l.b16 %v950
    %v1327 = vunpack.c.h.b16 %v950
    %v1328 = vunpack.c.l.b16 %v951
    %v1329 = vunpack.c.h.b16 %v951
    %v1330 = vunpack.c.l.b16 %v952
    %v1331 = vunpack.c.h.b16 %v952
    %v1332 = vunpack.c.l.b16 %v953
    %v1333 = vunpack.c.h.b16 %v953
    %v1334 = vunpack.c.l.b16 %v954
    %v1335 = vunpack.c.h.b16 %v954
    %v1336 = vunpack.c.l.b16 %v955
    %v1337 = vunpack.c.h.b16 %v955
    %v1338 = vunpack.c.l.b16 %v956
    %v1339 = vunpack.c.h.b16 %v956
    %v1340 = vunpack.c.l.b16 %v957
    %v1341 = vunpack.c.h.b16 %v957
    %v1342 = vunpack.c.l.b16 %v958
    %v1343 = vunpack.c.h.b16 %v958
    %v1344 = vunpack.c.l.b16 %v959
    %v1345 = vunpack.c.h.b16 %v959
    %v1346 = vunpack.c.l.b16 %v960
    %v1347 = vunpack.c.h.b16 %v960
    %v1348 = vunpack.c.l.b16 %v961
    %v1349 = vunpack.c.h.b16 %v961
    %v1350 = vunpack.c.l.b16 %v962
    %v1351 = vunpack.c.h.b16 %v962
    %v1352 = vunpack.c.l.b16 %v963
    %v1353 = vunpack.c.h.b16 %v963
    %v1354 = vunpack.c.l.b16 %v964
    %v1355 = vunpack.c.h.b16 %v964
    %v1356 = vunpack.c.l.b16 %v965
    %v1357 = vunpack.c.h.b16 %v965
    %v1358 = vunpack.c.l.b16 %v966
    %v1359 = vunpack.c.h.b16 %v966
    %v1360 = vunpack.c.l.b16 %v967
    %v1361 = vunpack.c.h.b16 %v967
    %v1362 = vunpack.c.l.b16 %v968
    %v1363 = vunpack.c.h.b16 %v968
    %v1364 = vunpack.c.l.b16 %v969
    %v1365 = vunpack.c.h.b16 %v969
    %v1366 = vunpack.c.l.b16 %v970
    %v1367 = vunpack.c.h.b16 %v970
    %v1368 = vunpack.c.l.b16 %v971
    %v1369 = vunpack.c.h.b16 %v971
    %v1370 = vunpack.c.l.b16 %v972
    %v1371 = vunpack.c.h.b16 %v972
    %v1372 = vunpack.c.l.b16 %v973
    %v1373 = vunpack.c.h.b16 %v973
    %v1374 = vunpack.c.l.b16 %v974
    %v1375 = vunpack.c.h.b16 %v974
    %v1376 = vunpack.c.l.b16 %v975
    %v1377 = vunpack.c.h.b16 %v975
    %v1378 = vunpack.c.l.b16 %v976
    %v1379 = vunpack.c.h.b16 %v976
    %v1380 = vunpack.c.l.b16 %v977
    %v1381 = vunpack.c.h.b16 %v977
    %v1382 = vunpack.c.l.b16 %v978
    %v1383 = vunpack.c.h.b16 %v978
    %v1384 = vunpack.c.l.b16 %v979
    %v1385 = vunpack.c.h.b16 %v979
    %v1386 = vpack.c.b16 %v1134, %v1130
    %v1387 = vpack.c.b16 %v1135, %v1131
    %v1388 = vpack.c.b16 %v1136, %v1132
    %v1389 = vpack.c.b16 %v1137, %v1133
    %v1390 = vpack.c.b16 %v1142, %v1138
    %v1391 = vpack.c.b16 %v1143, %v1139
    %v1392 = vpack.c.b16 %v1144, %v1140
    %v1393 = vpack.c.b16 %v1145, %v1141
    %v1394 = vpack.c.b16 %v1150, %v1146
    %v1395 = vpack.c.b16 %v1151, %v1147
    %v1396 = vpack.c.b16 %v1152, %v1148
    %v1397 = vpack.c.b16 %v1153, %v1149
    %v1398 = vpack.c.b16 %v1158, %v1154
    %v1399 = vpack.c.b16 %v1159, %v1155
    %v1400 = vpack.c.b16 %v1160, %v1156
    %v1401 = vpack.c.b16 %v1161, %v1157
    %v1402 = vpack.c.b16 %v1166, %v1162
    %v1403 = vpack.c.b16 %v1167, %v1163
    %v1404 = vpack.c.b16 %v1168, %v1164
    %v1405 = vpack.c.b16 %v1169, %v1165
    %v1406 = vpack.c.b16 %v1174, %v1170
    %v1407 = vpack.c.b16 %v1175, %v1171
    %v1408 = vpack.c.b16 %v1176, %v1172
    %v1409 = vpack.c.b16 %v1177, %v1173
    %v1410 = vpack.c.b16 %v1182, %v1178
    %v1411 = vpack.c.b16 %v1183, %v1179
    %v1412 = vpack.c.b16 %v1184, %v1180
    %v1413 = vpack.c.b16 %v1185, %v1181
    %v1414 = vpack.c.b16 %v1190, %v1186
    %v1415 = vpack.c.b16 %v1191, %v1187
    %v1416 = vpack.c.b16 %v1192, %v1188
    %v1417 = vpack.c.b16 %v1193, %v1189
    %v1418 = vpack.c.b16 %v1198, %v1194
    %v1419 = vpack.c.b16 %v1199, %v1195
    %v1420 = vpack.c.b16 %v1200, %v1196
    %v1421 = vpack.c.b16 %v1201, %v1197
    %v1422 = vpack.c.b16 %v1206, %v1202
    %v1423 = vpack.c.b16 %v1207, %v1203
    %v1424 = vpack.c.b16 %v1208, %v1204
    %v1425 = vpack.c.b16 %v1209, %v1205
    %v1426 = vpack.c.b16 %v1214, %v1210
    %v1427 = vpack.c.b16 %v1215, %v1211
    %v1428 = vpack.c.b16 %v1216, %v1212
    %v1429 = vpack.c.b16 %v1217, %v1213
    %v1430 = vpack.c.b16 %v1222, %v1218
    %v1431 = vpack.c.b16 %v1223, %v1219
    %v1432 = vpack.c.b16 %v1224, %v1220
    %v1433 = vpack.c.b16 %v1225, %v1221
    %v1434 = vpack.c.b16 %v1230, %v1226
    %v1435 = vpack.c.b16 %v1231, %v1227
    %v1436 = vpack.c.b16 %v1232, %v1228
    %v1437 = vpack.c.b16 %v1233, %v1229
    %v1438 = vpack.c.b16 %v1238, %v1234
    %v1439 = vpack.c.b16 %v1239, %v1235
    %v1440 = vpack.c.b16 %v1240, %v1236
    %v1441 = vpack.c.b16 %v1241, %v1237
    %v1442 = vpack.c.b16 %v1246, %v1242
    %v1443 = vpack.c.b16 %v1247, %v1243
    %v1444 = vpack.c.b16 %v1248, %v1244
    %v1445 = vpack.c.b16 %v1249, %v1245
    %v1446 = vpack.c.b16 %v1254, %v1250
    %v1447 = vpack.c.b16 %v1255, %v1251
    %v1448 = vpack.c.b16 %v1256, %v1252
    %v1449 = vpack.c.b16 %v1257, %v1253
    %v1450 = vpack.c.b16 %v1262, %v1258
    %v1451 = vpack.c.b16 %v1263, %v1259
    %v1452 = vpack.c.b16 %v1264, %v1260
    %v1453 = vpack.c.b16 %v1265, %v1261
    %v1454 = vpack.c.b16 %v1270, %v1266
    %v1455 = vpack.c.b16 %v1271, %v1267
    %v1456 = vpack.c.b16 %v1272, %v1268
    %v1457 = vpack.c.b16 %v1273, %v1269
    %v1458 = vpack.c.b16 %v1278, %v1274
    %v1459 = vpack.c.b16 %v1279, %v1275
    %v1460 = vpack.c.b16 %v1280, %v1276
    %v1461 = vpack.c.b16 %v1281, %v1277
    %v1462 = vpack.c.b16 %v1286, %v1282
    %v1463 = vpack.c.b16 %v1287, %v1283
    %v1464 = vpack.c.b16 %v1288, %v1284
    %v1465 = vpack.c.b16 %v1289, %v1285
    %v1466 = vpack.c.b16 %v1294, %v1290
    %v1467 = vpack.c.b16 %v1295, %v1291
    %v1468 = vpack.c.b16 %v1296, %v1292
    %v1469 = vpack.c.b16 %v1297, %v1293
    %v1470 = vpack.c.b16 %v1302, %v1298
    %v1471 = vpack.c.b16 %v1303, %v1299
    %v1472 = vpack.c.b16 %v1304, %v1300
    %v1473 = vpack.c.b16 %v1305, %v1301
    %v1474 = vpack.c.b16 %v1310, %v1306
    %v1475 = vpack.c.b16 %v1311, %v1307
    %v1476 = vpack.c.b16 %v1312, %v1308
    %v1477 = vpack.c.b16 %v1313, %v1309
    %v1478 = vpack.c.b16 %v1318, %v1314
    %v1479 = vpack.c.b16 %v1319, %v1315
    %v1480 = vpack.c.b16 %v1320, %v1316
    %v1481 = vpack.c.b16 %v1321, %v1317
    %v1482 = vpack.c.b16 %v1326, %v1322
    %v1483 = vpack.c.b16 %v1327, %v1323
    %v1484 = vpack.c.b16 %v1328, %v1324
    %v1485 = vpack.c.b16 %v1329, %v1325
    %v1486 = vpack.c.b16 %v1334, %v1330
    %v1487 = vpack.c.b16 %v1335, %v1331
    %v1488 = vpack.c.b16 %v1336, %v1332
    %v1489 = vpack.c.b16 %v1337, %v1333
    %v1490 = vpack.c.b16 %v1342, %v1338
    %v1491 = vpack.c.b16 %v1343, %v1339
    %v1492 = vpack.c.b16 %v1344, %v1340
    %v1493 = vpack.c.b16 %v1345, %v1341
    %v1494 = vpack.c.b16 %v1350, %v1346
    %v1495 = vpack.c.b16 %v1351, %v1347
    %v1496 = vpack.c.b16 %v1352, %v1348
    %v1497 = vpack.c.b16 %v1353, %v1349
    %v1498 = vpack.c.b16 %v1358, %v1354
    %v1499 = vpack.c.b16 %v1359, %v1355
    %v1500 = vpack.c.b16 %v1360, %v1356
    %v1501 = vpack.c.b16 %v1361, %v1357
    %v1502 = vpack.c.b16 %v1366, %v1362
    %v1503 = vpack.c.b16 %v1367, %v1363
    %v1504 = vpack.c.b16 %v1368, %v1364
    %v1505 = vpack.c.b16 %v1369, %v1365
    %v1506 = vpack.c.b16 %v1374, %v1370
    %v1507 = vpack.c.b16 %v1375, %v1371
    %v1508 = vpack.c.b16 %v1376, %v1372
    %v1509 = vpack.c.b16 %v1377, %v1373
    %v1510 = vpack.c.b16 %v1382, %v1378
    %v1511 = vpack.c.b16 %v1383, %v1379
    %v1512 = vpack.c.b16 %v1384, %v1380
    %v1513 = vpack.c.b16 %v1385, %v1381
    %1642 = vmatprep.subr.bf16.mxu0 %v1387
    %1643 = vmatpush1.bf16.msra.mxu0 %v1386
    %1644 = vmatprep.subr.bf16.mxu0 %v1391
    %1645 = vmatpush1.bf16.msra.mxu0 %v1390
    %1646 = vmatprep.subr.bf16.mxu0 %v1395
    %1647 = vmatpush1.bf16.msra.mxu0 %v1394
    %1648 = vmatprep.subr.bf16.mxu0 %v1399
    %1649 = vmatpush1.bf16.msra.mxu0 %v1398
    %1650 = vmatprep.subr.bf16.mxu0 %v1403
    %1651 = vmatpush1.bf16.msra.mxu0 %v1402
    %1652 = vmatprep.subr.bf16.mxu0 %v1407
    %1653 = vmatpush1.bf16.msra.mxu0 %v1406
    %1654 = vmatprep.subr.bf16.mxu0 %v1411
    %1655 = vmatpush1.bf16.msra.mxu0 %v1410
    %1656 = vmatprep.subr.bf16.mxu0 %v1415
    %1657 = vmatpush1.bf16.msra.mxu0 %v1414
    %1658 = vmatprep.subr.bf16.mxu0 %v1419
    %1659 = vmatpush1.bf16.msra.mxu0 %v1418
    %1660 = vmatprep.subr.bf16.mxu0 %v1423
    %1661 = vmatpush1.bf16.msra.mxu0 %v1422
    %1662 = vmatprep.subr.bf16.mxu0 %v1427
    %1663 = vmatpush1.bf16.msra.mxu0 %v1426
    %1664 = vmatprep.subr.bf16.mxu0 %v1431
    %1665 = vmatpush1.bf16.msra.mxu0 %v1430
    %1666 = vmatprep.subr.bf16.mxu0 %v1435
    %1667 = vmatpush1.bf16.msra.mxu0 %v1434
    %1668 = vmatprep.subr.bf16.mxu0 %v1439
    %1669 = vmatpush1.bf16.msra.mxu0 %v1438
    %1670 = vmatprep.subr.bf16.mxu0 %v1443
    %1671 = vmatpush1.bf16.msra.mxu0 %v1442
    %1672 = vmatprep.subr.bf16.mxu0 %v1447
    %1673 = vmatpush1.bf16.msra.mxu0 %v1446
    %1674 = vmatprep.mubr.bf16.mxu0 %v789
    %1675 = vmatmul.mubr.bf16.gmra.mrb[0].mxu0 %v788
    %v1676 = vpop.f32.mrb[0].mxu0
    %v1677 = vadd.f32 %v985, %v1676
    %v1678 = vpop.f32.mrb[0].mxu0
    %v1679 = vadd.f32 %v989, %v1678
    %v1680 = vpop.f32.mrb[0].mxu0
    %v1681 = vadd.f32 %v985, %v1680
    %v1682 = vpop.f32.mrb[0].mxu0
    %v1683 = vadd.f32 %v989, %v1682
    %1684 = vmatprep.mubr.bf16.mxu0 %v793
    %1685 = vmatmul.mubr.bf16.gmra.mrb[0].mxu0 %v792
    %v1686 = vpop.f32.mrb[0].mxu0
    %v1687 = vadd.f32 %v985, %v1686
    %v1688 = vpop.f32.mrb[0].mxu0
    %v1689 = vadd.f32 %v989, %v1688
    %v1690 = vpop.f32.mrb[0].mxu0
    %v1691 = vadd.f32 %v985, %v1690
    %v1692 = vpop.f32.mrb[0].mxu0
    %v1693 = vadd.f32 %v989, %v1692
    %1694 = vmatprep.mubr.bf16.mxu0 %v797
    %1695 = vmatmul.mubr.bf16.gmra.mrb[0].mxu0 %v796
    %v1696 = vpop.f32.mrb[0].mxu0
    %v1697 = vadd.f32 %v985, %v1696
    %v1698 = vpop.f32.mrb[0].mxu0
    %v1699 = vadd.f32 %v989, %v1698
    %v1700 = vpop.f32.mrb[0].mxu0
    %v1701 = vadd.f32 %v985, %v1700
    %v1702 = vpop.f32.mrb[0].mxu0
    %v1703 = vadd.f32 %v989, %v1702
    %1704 = vmatprep.mubr.bf16.mxu0 %v801
    %1705 = vmatmul.mubr.bf16.gmra.mrb[0].mxu0 %v800
    %v1706 = vpop.f32.mrb[0].mxu0
    %v1707 = vadd.f32 %v985, %v1706
    %v1708 = vpop.f32.mrb[0].mxu0
    %v1709 = vadd.f32 %v989, %v1708
    %v1710 = vpop.f32.mrb[0].mxu0
    %v1711 = vadd.f32 %v985, %v1710
    %v1712 = vpop.f32.mrb[0].mxu0
    %v1713 = vadd.f32 %v989, %v1712
    %1714 = vmatprep.mubr.bf16.mxu0 %v805
    %1715 = vmatmul.mubr.bf16.gmra.mrb[0].mxu0 %v804
    %v1716 = vpop.f32.mrb[0].mxu0
    %v1717 = vadd.f32 %v985, %v1716
    %v1718 = vpop.f32.mrb[0].mxu0
    %v1719 = vadd.f32 %v989, %v1718
    %v1720 = vpop.f32.mrb[0].mxu0
    %v1721 = vadd.f32 %v985, %v1720
    %v1722 = vpop.f32.mrb[0].mxu0
    %v1723 = vadd.f32 %v989, %v1722
    %1724 = vmatprep.mubr.bf16.mxu0 %v809
    %1725 = vmatmul.mubr.bf16.gmra.mrb[0].mxu0 %v808
    %v1726 = vpop.f32.mrb[0].mxu0
    %v1727 = vadd.f32 %v985, %v1726
    %v1728 = vpop.f32.mrb[0].mxu0
    %v1729 = vadd.f32 %v989, %v1728
    %v1730 = vpop.f32.mrb[0].mxu0
    %v1731 = vadd.f32 %v985, %v1730
    %v1732 = vpop.f32.mrb[0].mxu0
    %v1733 = vadd.f32 %v989, %v1732
    %1734 = vmatprep.mubr.bf16.mxu0 %v813
    %1735 = vmatmul.mubr.bf16.gmra.mrb[0].mxu0 %v812
    %v1736 = vpop.f32.mrb[0].mxu0
    %v1737 = vadd.f32 %v985, %v1736
    %v1738 = vpop.f32.mrb[0].mxu0
    %v1739 = vadd.f32 %v989, %v1738
    %v1740 = vpop.f32.mrb[0].mxu0
    %v1741 = vadd.f32 %v985, %v1740
    %v1742 = vpop.f32.mrb[0].mxu0
    %v1743 = vadd.f32 %v989, %v1742
    %1744 = vmatprep.mubr.bf16.mxu0 %v817
    %1745 = vmatmul.mubr.bf16.gmra.mrb[0].mxu0 %v816
    %v1746 = vpop.f32.mrb[0].mxu0
    %v1747 = vadd.f32 %v985, %v1746
    %v1748 = vpop.f32.mrb[0].mxu0
    %v1749 = vadd.f32 %v989, %v1748
    %v1750 = vpop.f32.mrb[0].mxu0
    %v1751 = vadd.f32 %v985, %v1750
    %v1752 = vpop.f32.mrb[0].mxu0
    %v1753 = vadd.f32 %v989, %v1752
    %1754 = vmatprep.mubr.bf16.mxu0 %v821
    %1755 = vmatmul.mubr.bf16.gmra.mrb[0].mxu0 %v820
    %v1756 = vpop.f32.mrb[0].mxu0
    %v1757 = vadd.f32 %v985, %v1756
    %v1758 = vpop.f32.mrb[0].mxu0
    %v1759 = vadd.f32 %v989, %v1758
    %v1760 = vpop.f32.mrb[0].mxu0
    %v1761 = vadd.f32 %v985, %v1760
    %v1762 = vpop.f32.mrb[0].mxu0
    %v1763 = vadd.f32 %v989, %v1762
    %1764 = vmatprep.mubr.bf16.mxu0 %v825
    %1765 = vmatmul.mubr.bf16.gmra.mrb[0].mxu0 %v824
    %v1766 = vpop.f32.mrb[0].mxu0
    %v1767 = vadd.f32 %v985, %v1766
    %v1768 = vpop.f32.mrb[0].mxu0
    %v1769 = vadd.f32 %v989, %v1768
    %v1770 = vpop.f32.mrb[0].mxu0
    %v1771 = vadd.f32 %v985, %v1770
    %v1772 = vpop.f32.mrb[0].mxu0
    %v1773 = vadd.f32 %v989, %v1772
    %1774 = vmatprep.mubr.bf16.mxu0 %v829
    %1775 = vmatmul.mubr.bf16.gmra.mrb[0].mxu0 %v828
    %v1776 = vpop.f32.mrb[0].mxu0
    %v1777 = vadd.f32 %v985, %v1776
    %v1778 = vpop.f32.mrb[0].mxu0
    %v1779 = vadd.f32 %v989, %v1778
    %v1780 = vpop.f32.mrb[0].mxu0
    %v1781 = vadd.f32 %v985, %v1780
    %v1782 = vpop.f32.mrb[0].mxu0
    %v1783 = vadd.f32 %v989, %v1782
    %1784 = vmatprep.mubr.bf16.mxu0 %v833
    %1785 = vmatmul.mubr.bf16.gmra.mrb[0].mxu0 %v832
    %v1786 = vpop.f32.mrb[0].mxu0
    %v1787 = vadd.f32 %v985, %v1786
    %v1788 = vpop.f32.mrb[0].mxu0
    %v1789 = vadd.f32 %v989, %v1788
    %v1790 = vpop.f32.mrb[0].mxu0
    %v1791 = vadd.f32 %v985, %v1790
    %v1792 = vpop.f32.mrb[0].mxu0
    %v1793 = vadd.f32 %v989, %v1792
    %1794 = vmatprep.mubr.bf16.mxu0 %v837
    %1795 = vmatmul.mubr.bf16.gmra.mrb[0].mxu0 %v836
    %v1796 = vpop.f32.mrb[0].mxu0
    %v1797 = vadd.f32 %v985, %v1796
    %v1798 = vpop.f32.mrb[0].mxu0
    %v1799 = vadd.f32 %v989, %v1798
    %v1800 = vpop.f32.mrb[0].mxu0
    %v1801 = vadd.f32 %v985, %v1800
    %v1802 = vpop.f32.mrb[0].mxu0
    %v1803 = vadd.f32 %v989, %v1802
    %1804 = vmatprep.mubr.bf16.mxu0 %v841
    %1805 = vmatmul.mubr.bf16.gmra.mrb[0].mxu0 %v840
    %v1806 = vpop.f32.mrb[0].mxu0
    %v1807 = vadd.f32 %v985, %v1806
    %v1808 = vpop.f32.mrb[0].mxu0
    %v1809 = vadd.f32 %v989, %v1808
    %v1810 = vpop.f32.mrb[0].mxu0
    %v1811 = vadd.f32 %v985, %v1810
    %v1812 = vpop.f32.mrb[0].mxu0
    %v1813 = vadd.f32 %v989, %v1812
    %1814 = vmatprep.mubr.bf16.mxu0 %v845
    %1815 = vmatmul.mubr.bf16.gmra.mrb[0].mxu0 %v844
    %v1816 = vpop.f32.mrb[0].mxu0
    %v1817 = vadd.f32 %v985, %v1816
    %v1818 = vpop.f32.mrb[0].mxu0
    %v1819 = vadd.f32 %v989, %v1818
    %v1820 = vpop.f32.mrb[0].mxu0
    %v1821 = vadd.f32 %v985, %v1820
    %v1822 = vpop.f32.mrb[0].mxu0
    %v1823 = vadd.f32 %v989, %v1822
    %1824 = vmatprep.mubr.bf16.mxu0 %v849
    %1825 = vmatmul.mubr.bf16.gmra.mrb[0].mxu0 %v848
    %v1826 = vpop.f32.mrb[0].mxu0
    %v1827 = vadd.f32 %v985, %v1826
    %v1828 = vpop.f32.mrb[0].mxu0
    %v1829 = vadd.f32 %v989, %v1828
    %v1830 = vpop.f32.mrb[0].mxu0
    %v1831 = vadd.f32 %v985, %v1830
    %v1832 = vpop.f32.mrb[0].mxu0
    %v1833 = vadd.f32 %v989, %v1832
    %1834 = vdwg.mxu0
    %1835 = vmatprep.subr.bf16.mxu0 %v1451
    %1836 = vmatpush1.bf16.msra.mxu0 %v1450
    %1837 = vmatprep.subr.bf16.mxu0 %v1455
    %1838 = vmatpush1.bf16.msra.mxu0 %v1454
    %1839 = vmatprep.subr.bf16.mxu0 %v1459
    %1840 = vmatpush1.bf16.msra.mxu0 %v1458
    %1841 = vmatprep.subr.bf16.mxu0 %v1463
    %1842 = vmatpush1.bf16.msra.mxu0 %v1462
    %1843 = vmatprep.subr.bf16.mxu0 %v1467
    %1844 = vmatpush1.bf16.msra.mxu0 %v1466
    %1845 = vmatprep.subr.bf16.mxu0 %v1471
    %1846 = vmatpush1.bf16.msra.mxu0 %v1470
    %1847 = vmatprep.subr.bf16.mxu0 %v1475
    %1848 = vmatpush1.bf16.msra.mxu0 %v1474
    %1849 = vmatprep.subr.bf16.mxu0 %v1479
    %1850 = vmatpush1.bf16.msra.mxu0 %v1478
    %1851 = vmatprep.subr.bf16.mxu0 %v1483
    %1852 = vmatpush1.bf16.msra.mxu0 %v1482
    %1853 = vmatprep.subr.bf16.mxu0 %v1487
    %1854 = vmatpush1.bf16.msra.mxu0 %v1486
    %1855 = vmatprep.subr.bf16.mxu0 %v1491
    %1856 = vmatpush1.bf16.msra.mxu0 %v1490
    %1857 = vmatprep.subr.bf16.mxu0 %v1495
    %1858 = vmatpush1.bf16.msra.mxu0 %v1494
    %1859 = vmatprep.subr.bf16.mxu0 %v1499
    %1860 = vmatpush1.bf16.msra.mxu0 %v1498
    %1861 = vmatprep.subr.bf16.mxu0 %v1503
    %1862 = vmatpush1.bf16.msra.mxu0 %v1502
    %1863 = vmatprep.subr.bf16.mxu0 %v1507
    %1864 = vmatpush1.bf16.msra.mxu0 %v1506
    %1865 = vmatprep.subr.bf16.mxu0 %v1511
    %1866 = vmatpush1.bf16.msra.mxu0 %v1510
    %1867 = vmatprep.mubr.bf16.mxu0 %v791
    %1868 = vmatmul.mubr.bf16.gmra.mrb[0].mxu0 %v790
    %v1869 = vpop.f32.mrb[0].mxu0
    %v1870 = vadd.f32 %v1677, %v1869
    %v1871 = vpop.f32.mrb[0].mxu0
    %v1872 = vadd.f32 %v1679, %v1871
    %v1873 = vpop.f32.mrb[0].mxu0
    %v1874 = vadd.f32 %v1681, %v1873
    %v1875 = vpop.f32.mrb[0].mxu0
    %v1876 = vadd.f32 %v1683, %v1875
    %1877 = vmatprep.mubr.bf16.mxu0 %v795
    %1878 = vmatmul.mubr.bf16.gmra.mrb[0].mxu0 %v794
    %v1879 = vpop.f32.mrb[0].mxu0
    %v1880 = vadd.f32 %v1687, %v1879
    %v1881 = vpop.f32.mrb[0].mxu0
    %v1882 = vadd.f32 %v1689, %v1881
    %v1883 = vpop.f32.mrb[0].mxu0
    %v1884 = vadd.f32 %v1691, %v1883
    %v1885 = vpop.f32.mrb[0].mxu0
    %v1886 = vadd.f32 %v1693, %v1885
    %1887 = vmatprep.mubr.bf16.mxu0 %v799
    %1888 = vmatmul.mubr.bf16.gmra.mrb[0].mxu0 %v798
    %v1889 = vpop.f32.mrb[0].mxu0
    %v1890 = vadd.f32 %v1697, %v1889
    %v1891 = vpop.f32.mrb[0].mxu0
    %v1892 = vadd.f32 %v1699, %v1891
    %v1893 = vpop.f32.mrb[0].mxu0
    %v1894 = vadd.f32 %v1701, %v1893
    %v1895 = vpop.f32.mrb[0].mxu0
    %v1896 = vadd.f32 %v1703, %v1895
    %1897 = vmatprep.mubr.bf16.mxu0 %v803
    %1898 = vmatmul.mubr.bf16.gmra.mrb[0].mxu0 %v802
    %v1899 = vpop.f32.mrb[0].mxu0
    %v1900 = vadd.f32 %v1707, %v1899
    %v1901 = vpop.f32.mrb[0].mxu0
    %v1902 = vadd.f32 %v1709, %v1901
    %v1903 = vpop.f32.mrb[0].mxu0
    %v1904 = vadd.f32 %v1711, %v1903
    %v1905 = vpop.f32.mrb[0].mxu0
    %v1906 = vadd.f32 %v1713, %v1905
    %1907 = vmatprep.mubr.bf16.mxu0 %v807
    %1908 = vmatmul.mubr.bf16.gmra.mrb[0].mxu0 %v806
    %v1909 = vpop.f32.mrb[0].mxu0
    %v1910 = vadd.f32 %v1717, %v1909
    %v1911 = vpop.f32.mrb[0].mxu0
    %v1912 = vadd.f32 %v1719, %v1911
    %v1913 = vpop.f32.mrb[0].mxu0
    %v1914 = vadd.f32 %v1721, %v1913
    %v1915 = vpop.f32.mrb[0].mxu0
    %v1916 = vadd.f32 %v1723, %v1915
    %1917 = vmatprep.mubr.bf16.mxu0 %v811
    %1918 = vmatmul.mubr.bf16.gmra.mrb[0].mxu0 %v810
    %v1919 = vpop.f32.mrb[0].mxu0
    %v1920 = vadd.f32 %v1727, %v1919
    %v1921 = vpop.f32.mrb[0].mxu0
    %v1922 = vadd.f32 %v1729, %v1921
    %v1923 = vpop.f32.mrb[0].mxu0
    %v1924 = vadd.f32 %v1731, %v1923
    %v1925 = vpop.f32.mrb[0].mxu0
    %v1926 = vadd.f32 %v1733, %v1925
    %1927 = vmatprep.mubr.bf16.mxu0 %v815
    %1928 = vmatmul.mubr.bf16.gmra.mrb[0].mxu0 %v814
    %v1929 = vpop.f32.mrb[0].mxu0
    %v1930 = vadd.f32 %v1737, %v1929
    %v1931 = vpop.f32.mrb[0].mxu0
    %v1932 = vadd.f32 %v1739, %v1931
    %v1933 = vpop.f32.mrb[0].mxu0
    %v1934 = vadd.f32 %v1741, %v1933
    %v1935 = vpop.f32.mrb[0].mxu0
    %v1936 = vadd.f32 %v1743, %v1935
    %1937 = vmatprep.mubr.bf16.mxu0 %v819
    %1938 = vmatmul.mubr.bf16.gmra.mrb[0].mxu0 %v818
    %v1939 = vpop.f32.mrb[0].mxu0
    %v1940 = vadd.f32 %v1747, %v1939
    %v1941 = vpop.f32.mrb[0].mxu0
    %v1942 = vadd.f32 %v1749, %v1941
    %v1943 = vpop.f32.mrb[0].mxu0
    %v1944 = vadd.f32 %v1751, %v1943
    %v1945 = vpop.f32.mrb[0].mxu0
    %v1946 = vadd.f32 %v1753, %v1945
    %1947 = vmatprep.mubr.bf16.mxu0 %v823
    %1948 = vmatmul.mubr.bf16.gmra.mrb[0].mxu0 %v822
    %v1949 = vpop.f32.mrb[0].mxu0
    %v1950 = vadd.f32 %v1757, %v1949
    %v1951 = vpop.f32.mrb[0].mxu0
    %v1952 = vadd.f32 %v1759, %v1951
    %v1953 = vpop.f32.mrb[0].mxu0
    %v1954 = vadd.f32 %v1761, %v1953
    %v1955 = vpop.f32.mrb[0].mxu0
    %v1956 = vadd.f32 %v1763, %v1955
    %1957 = vmatprep.mubr.bf16.mxu0 %v827
    %1958 = vmatmul.mubr.bf16.gmra.mrb[0].mxu0 %v826
    %v1959 = vpop.f32.mrb[0].mxu0
    %v1960 = vadd.f32 %v1767, %v1959
    %v1961 = vpop.f32.mrb[0].mxu0
    %v1962 = vadd.f32 %v1769, %v1961
    %v1963 = vpop.f32.mrb[0].mxu0
    %v1964 = vadd.f32 %v1771, %v1963
    %v1965 = vpop.f32.mrb[0].mxu0
    %v1966 = vadd.f32 %v1773, %v1965
    %1967 = vmatprep.mubr.bf16.mxu0 %v831
    %1968 = vmatmul.mubr.bf16.gmra.mrb[0].mxu0 %v830
    %v1969 = vpop.f32.mrb[0].mxu0
    %v1970 = vadd.f32 %v1777, %v1969
    %v1971 = vpop.f32.mrb[0].mxu0
    %v1972 = vadd.f32 %v1779, %v1971
    %v1973 = vpop.f32.mrb[0].mxu0
    %v1974 = vadd.f32 %v1781, %v1973
    %v1975 = vpop.f32.mrb[0].mxu0
    %v1976 = vadd.f32 %v1783, %v1975
    %1977 = vmatprep.mubr.bf16.mxu0 %v835
    %1978 = vmatmul.mubr.bf16.gmra.mrb[0].mxu0 %v834
    %v1979 = vpop.f32.mrb[0].mxu0
    %v1980 = vadd.f32 %v1787, %v1979
    %v1981 = vpop.f32.mrb[0].mxu0
    %v1982 = vadd.f32 %v1789, %v1981
    %v1983 = vpop.f32.mrb[0].mxu0
    %v1984 = vadd.f32 %v1791, %v1983
    %v1985 = vpop.f32.mrb[0].mxu0
    %v1986 = vadd.f32 %v1793, %v1985
    %1987 = vmatprep.mubr.bf16.mxu0 %v839
    %1988 = vmatmul.mubr.bf16.gmra.mrb[0].mxu0 %v838
    %v1989 = vpop.f32.mrb[0].mxu0
    %v1990 = vadd.f32 %v1797, %v1989
    %v1991 = vpop.f32.mrb[0].mxu0
    %v1992 = vadd.f32 %v1799, %v1991
    %v1993 = vpop.f32.mrb[0].mxu0
    %v1994 = vadd.f32 %v1801, %v1993
    %v1995 = vpop.f32.mrb[0].mxu0
    %v1996 = vadd.f32 %v1803, %v1995
    %1997 = vmatprep.mubr.bf16.mxu0 %v843
    %1998 = vmatmul.mubr.bf16.gmra.mrb[0].mxu0 %v842
    %v1999 = vpop.f32.mrb[0].mxu0
    %v2000 = vadd.f32 %v1807, %v1999
    %v2001 = vpop.f32.mrb[0].mxu0
    %v2002 = vadd.f32 %v1809, %v2001
    %v2003 = vpop.f32.mrb[0].mxu0
    %v2004 = vadd.f32 %v1811, %v2003
    %v2005 = vpop.f32.mrb[0].mxu0
    %v2006 = vadd.f32 %v1813, %v2005
    %2007 = vmatprep.mubr.bf16.mxu0 %v847
    %2008 = vmatmul.mubr.bf16.gmra.mrb[0].mxu0 %v846
    %v2009 = vpop.f32.mrb[0].mxu0
    %v2010 = vadd.f32 %v1817, %v2009
    %v2011 = vpop.f32.mrb[0].mxu0
    %v2012 = vadd.f32 %v1819, %v2011
    %v2013 = vpop.f32.mrb[0].mxu0
    %v2014 = vadd.f32 %v1821, %v2013
    %v2015 = vpop.f32.mrb[0].mxu0
    %v2016 = vadd.f32 %v1823, %v2015
    %2017 = vmatprep.mubr.bf16.mxu0 %v851
    %2018 = vmatmul.mubr.bf16.gmra.mrb[0].mxu0 %v850
    %v2019 = vpop.f32.mrb[0].mxu0
    %v2020 = vadd.f32 %v1827, %v2019
    %v2021 = vpop.f32.mrb[0].mxu0
    %v2022 = vadd.f32 %v1829, %v2021
    %v2023 = vpop.f32.mrb[0].mxu0
    %v2024 = vadd.f32 %v1831, %v2023
    %v2025 = vpop.f32.mrb[0].mxu0
    %v2026 = vadd.f32 %v1833, %v2025
    %2027 = vdwg.mxu0
    %2028 = vmatprep.subr.bf16.mxu0 %v1389
    %2029 = vmatpush1.bf16.msra.mxu0 %v1388
    %2030 = vmatprep.subr.bf16.mxu0 %v1393
    %2031 = vmatpush1.bf16.msra.mxu0 %v1392
    %2032 = vmatprep.subr.bf16.mxu0 %v1397
    %2033 = vmatpush1.bf16.msra.mxu0 %v1396
    %2034 = vmatprep.subr.bf16.mxu0 %v1401
    %2035 = vmatpush1.bf16.msra.mxu0 %v1400
    %2036 = vmatprep.subr.bf16.mxu0 %v1405
    %2037 = vmatpush1.bf16.msra.mxu0 %v1404
    %2038 = vmatprep.subr.bf16.mxu0 %v1409
    %2039 = vmatpush1.bf16.msra.mxu0 %v1408
    %2040 = vmatprep.subr.bf16.mxu0 %v1413
    %2041 = vmatpush1.bf16.msra.mxu0 %v1412
    %2042 = vmatprep.subr.bf16.mxu0 %v1417
    %2043 = vmatpush1.bf16.msra.mxu0 %v1416
    %2044 = vmatprep.subr.bf16.mxu0 %v1421
    %2045 = vmatpush1.bf16.msra.mxu0 %v1420
    %2046 = vmatprep.subr.bf16.mxu0 %v1425
    %2047 = vmatpush1.bf16.msra.mxu0 %v1424
    %2048 = vmatprep.subr.bf16.mxu0 %v1429
    %2049 = vmatpush1.bf16.msra.mxu0 %v1428
    %2050 = vmatprep.subr.bf16.mxu0 %v1433
    %2051 = vmatpush1.bf16.msra.mxu0 %v1432
    %2052 = vmatprep.subr.bf16.mxu0 %v1437
    %2053 = vmatpush1.bf16.msra.mxu0 %v1436
    %2054 = vmatprep.subr.bf16.mxu0 %v1441
    %2055 = vmatpush1.bf16.msra.mxu0 %v1440
    %2056 = vmatprep.subr.bf16.mxu0 %v1445
    %2057 = vmatpush1.bf16.msra.mxu0 %v1444
    %2058 = vmatprep.subr.bf16.mxu0 %v1449
    %2059 = vmatpush1.bf16.msra.mxu0 %v1448
    %2060 = vmatprep.mubr.bf16.mxu0 %v789
    %2061 = vmatmul.mubr.bf16.gmra.mrb[0].mxu0 %v788
    %v2062 = vpop.f32.mrb[0].mxu0
    %v2063 = vadd.f32 %v993, %v2062
    %v2064 = vpop.f32.mrb[0].mxu0
    %v2065 = vadd.f32 %v997, %v2064
    %v2066 = vpop.f32.mrb[0].mxu0
    %v2067 = vadd.f32 %v993, %v2066
    %v2068 = vpop.f32.mrb[0].mxu0
    %v2069 = vadd.f32 %v997, %v2068
    %2070 = vmatprep.mubr.bf16.mxu0 %v793
    %2071 = vmatmul.mubr.bf16.gmra.mrb[0].mxu0 %v792
    %v2072 = vpop.f32.mrb[0].mxu0
    %v2073 = vadd.f32 %v993, %v2072
    %v2074 = vpop.f32.mrb[0].mxu0
    %v2075 = vadd.f32 %v997, %v2074
    %v2076 = vpop.f32.mrb[0].mxu0
    %v2077 = vadd.f32 %v993, %v2076
    %v2078 = vpop.f32.mrb[0].mxu0
    %v2079 = vadd.f32 %v997, %v2078
    %2080 = vmatprep.mubr.bf16.mxu0 %v797
    %2081 = vmatmul.mubr.bf16.gmra.mrb[0].mxu0 %v796
    %v2082 = vpop.f32.mrb[0].mxu0
    %v2083 = vadd.f32 %v993, %v2082
    %v2084 = vpop.f32.mrb[0].mxu0
    %v2085 = vadd.f32 %v997, %v2084
    %v2086 = vpop.f32.mrb[0].mxu0
    %v2087 = vadd.f32 %v993, %v2086
    %v2088 = vpop.f32.mrb[0].mxu0
    %v2089 = vadd.f32 %v997, %v2088
    %2090 = vmatprep.mubr.bf16.mxu0 %v801
    %2091 = vmatmul.mubr.bf16.gmra.mrb[0].mxu0 %v800
    %v2092 = vpop.f32.mrb[0].mxu0
    %v2093 = vadd.f32 %v993, %v2092
    %v2094 = vpop.f32.mrb[0].mxu0
    %v2095 = vadd.f32 %v997, %v2094
    %v2096 = vpop.f32.mrb[0].mxu0
    %v2097 = vadd.f32 %v993, %v2096
    %v2098 = vpop.f32.mrb[0].mxu0
    %v2099 = vadd.f32 %v997, %v2098
    %2100 = vmatprep.mubr.bf16.mxu0 %v805
    %2101 = vmatmul.mubr.bf16.gmra.mrb[0].mxu0 %v804
    %v2102 = vpop.f32.mrb[0].mxu0
    %v2103 = vadd.f32 %v993, %v2102
    %v2104 = vpop.f32.mrb[0].mxu0
    %v2105 = vadd.f32 %v997, %v2104
    %v2106 = vpop.f32.mrb[0].mxu0
    %v2107 = vadd.f32 %v993, %v2106
    %v2108 = vpop.f32.mrb[0].mxu0
    %v2109 = vadd.f32 %v997, %v2108
    %2110 = vmatprep.mubr.bf16.mxu0 %v809
    %2111 = vmatmul.mubr.bf16.gmra.mrb[0].mxu0 %v808
    %v2112 = vpop.f32.mrb[0].mxu0
    %v2113 = vadd.f32 %v993, %v2112
    %v2114 = vpop.f32.mrb[0].mxu0
    %v2115 = vadd.f32 %v997, %v2114
    %v2116 = vpop.f32.mrb[0].mxu0
    %v2117 = vadd.f32 %v993, %v2116
    %v2118 = vpop.f32.mrb[0].mxu0
    %v2119 = vadd.f32 %v997, %v2118
    %2120 = vmatprep.mubr.bf16.mxu0 %v813
    %2121 = vmatmul.mubr.bf16.gmra.mrb[0].mxu0 %v812
    %v2122 = vpop.f32.mrb[0].mxu0
    %v2123 = vadd.f32 %v993, %v2122
    %v2124 = vpop.f32.mrb[0].mxu0
    %v2125 = vadd.f32 %v997, %v2124
    %v2126 = vpop.f32.mrb[0].mxu0
    %v2127 = vadd.f32 %v993, %v2126
    %v2128 = vpop.f32.mrb[0].mxu0
    %v2129 = vadd.f32 %v997, %v2128
    %2130 = vmatprep.mubr.bf16.mxu0 %v817
    %2131 = vmatmul.mubr.bf16.gmra.mrb[0].mxu0 %v816
    %v2132 = vpop.f32.mrb[0].mxu0
    %v2133 = vadd.f32 %v993, %v2132
    %v2134 = vpop.f32.mrb[0].mxu0
    %v2135 = vadd.f32 %v997, %v2134
    %v2136 = vpop.f32.mrb[0].mxu0
    %v2137 = vadd.f32 %v993, %v2136
    %v2138 = vpop.f32.mrb[0].mxu0
    %v2139 = vadd.f32 %v997, %v2138
    %2140 = vmatprep.mubr.bf16.mxu0 %v821
    %2141 = vmatmul.mubr.bf16.gmra.mrb[0].mxu0 %v820
    %v2142 = vpop.f32.mrb[0].mxu0
    %v2143 = vadd.f32 %v993, %v2142
    %v2144 = vpop.f32.mrb[0].mxu0
    %v2145 = vadd.f32 %v997, %v2144
    %v2146 = vpop.f32.mrb[0].mxu0
    %v2147 = vadd.f32 %v993, %v2146
    %v2148 = vpop.f32.mrb[0].mxu0
    %v2149 = vadd.f32 %v997, %v2148
    %2150 = vmatprep.mubr.bf16.mxu0 %v825
    %2151 = vmatmul.mubr.bf16.gmra.mrb[0].mxu0 %v824
    %v2152 = vpop.f32.mrb[0].mxu0
    %v2153 = vadd.f32 %v993, %v2152
    %v2154 = vpop.f32.mrb[0].mxu0
    %v2155 = vadd.f32 %v997, %v2154
    %v2156 = vpop.f32.mrb[0].mxu0
    %v2157 = vadd.f32 %v993, %v2156
    %v2158 = vpop.f32.mrb[0].mxu0
    %v2159 = vadd.f32 %v997, %v2158
    %2160 = vmatprep.mubr.bf16.mxu0 %v829
    %2161 = vmatmul.mubr.bf16.gmra.mrb[0].mxu0 %v828
    %v2162 = vpop.f32.mrb[0].mxu0
    %v2163 = vadd.f32 %v993, %v2162
    %v2164 = vpop.f32.mrb[0].mxu0
    %v2165 = vadd.f32 %v997, %v2164
    %v2166 = vpop.f32.mrb[0].mxu0
    %v2167 = vadd.f32 %v993, %v2166
    %v2168 = vpop.f32.mrb[0].mxu0
    %v2169 = vadd.f32 %v997, %v2168
    %2170 = vmatprep.mubr.bf16.mxu0 %v833
    %2171 = vmatmul.mubr.bf16.gmra.mrb[0].mxu0 %v832
    %v2172 = vpop.f32.mrb[0].mxu0
    %v2173 = vadd.f32 %v993, %v2172
    %v2174 = vpop.f32.mrb[0].mxu0
    %v2175 = vadd.f32 %v997, %v2174
    %v2176 = vpop.f32.mrb[0].mxu0
    %v2177 = vadd.f32 %v993, %v2176
    %v2178 = vpop.f32.mrb[0].mxu0
    %v2179 = vadd.f32 %v997, %v2178
    %2180 = vmatprep.mubr.bf16.mxu0 %v837
    %2181 = vmatmul.mubr.bf16.gmra.mrb[0].mxu0 %v836
    %v2182 = vpop.f32.mrb[0].mxu0
    %v2183 = vadd.f32 %v993, %v2182
    %v2184 = vpop.f32.mrb[0].mxu0
    %v2185 = vadd.f32 %v997, %v2184
    %v2186 = vpop.f32.mrb[0].mxu0
    %v2187 = vadd.f32 %v993, %v2186
    %v2188 = vpop.f32.mrb[0].mxu0
    %v2189 = vadd.f32 %v997, %v2188
    %2190 = vmatprep.mubr.bf16.mxu0 %v841
    %2191 = vmatmul.mubr.bf16.gmra.mrb[0].mxu0 %v840
    %v2192 = vpop.f32.mrb[0].mxu0
    %v2193 = vadd.f32 %v993, %v2192
    %v2194 = vpop.f32.mrb[0].mxu0
    %v2195 = vadd.f32 %v997, %v2194
    %v2196 = vpop.f32.mrb[0].mxu0
    %v2197 = vadd.f32 %v993, %v2196
    %v2198 = vpop.f32.mrb[0].mxu0
    %v2199 = vadd.f32 %v997, %v2198
    %2200 = vmatprep.mubr.bf16.mxu0 %v845
    %2201 = vmatmul.mubr.bf16.gmra.mrb[0].mxu0 %v844
    %v2202 = vpop.f32.mrb[0].mxu0
    %v2203 = vadd.f32 %v993, %v2202
    %v2204 = vpop.f32.mrb[0].mxu0
    %v2205 = vadd.f32 %v997, %v2204
    %v2206 = vpop.f32.mrb[0].mxu0
    %v2207 = vadd.f32 %v993, %v2206
    %v2208 = vpop.f32.mrb[0].mxu0
    %v2209 = vadd.f32 %v997, %v2208
    %2210 = vmatprep.mubr.bf16.mxu0 %v849
    %2211 = vmatmul.mubr.bf16.gmra.mrb[0].mxu0 %v848
    %v2212 = vpop.f32.mrb[0].mxu0
    %v2213 = vadd.f32 %v993, %v2212
    %v2214 = vpop.f32.mrb[0].mxu0
    %v2215 = vadd.f32 %v997, %v2214
    %v2216 = vpop.f32.mrb[0].mxu0
    %v2217 = vadd.f32 %v993, %v2216
    %v2218 = vpop.f32.mrb[0].mxu0
    %v2219 = vadd.f32 %v997, %v2218
    %2220 = vdwg.mxu0
    %2221 = vmatprep.subr.bf16.mxu0 %v1453
    %2222 = vmatpush1.bf16.msra.mxu0 %v1452
    %2223 = vmatprep.subr.bf16.mxu0 %v1457
    %2224 = vmatpush1.bf16.msra.mxu0 %v1456
    %2225 = vmatprep.subr.bf16.mxu0 %v1461
    %2226 = vmatpush1.bf16.msra.mxu0 %v1460
    %2227 = vmatprep.subr.bf16.mxu0 %v1465
    %2228 = vmatpush1.bf16.msra.mxu0 %v1464
    %2229 = vmatprep.subr.bf16.mxu0 %v1469
    %2230 = vmatpush1.bf16.msra.mxu0 %v1468
    %2231 = vmatprep.subr.bf16.mxu0 %v1473
    %2232 = vmatpush1.bf16.msra.mxu0 %v1472
    %2233 = vmatprep.subr.bf16.mxu0 %v1477
    %2234 = vmatpush1.bf16.msra.mxu0 %v1476
    %2235 = vmatprep.subr.bf16.mxu0 %v1481
    %2236 = vmatpush1.bf16.msra.mxu0 %v1480
    %2237 = vmatprep.subr.bf16.mxu0 %v1485
    %2238 = vmatpush1.bf16.msra.mxu0 %v1484
    %2239 = vmatprep.subr.bf16.mxu0 %v1489
    %2240 = vmatpush1.bf16.msra.mxu0 %v1488
    %2241 = vmatprep.subr.bf16.mxu0 %v1493
    %2242 = vmatpush1.bf16.msra.mxu0 %v1492
    %2243 = vmatprep.subr.bf16.mxu0 %v1497
    %2244 = vmatpush1.bf16.msra.mxu0 %v1496
    %2245 = vmatprep.subr.bf16.mxu0 %v1501
    %2246 = vmatpush1.bf16.msra.mxu0 %v1500
    %2247 = vmatprep.subr.bf16.mxu0 %v1505
    %2248 = vmatpush1.bf16.msra.mxu0 %v1504
    %2249 = vmatprep.subr.bf16.mxu0 %v1509
    %2250 = vmatpush1.bf16.msra.mxu0 %v1508
    %2251 = vmatprep.subr.bf16.mxu0 %v1513
    %2252 = vmatpush1.bf16.msra.mxu0 %v1512
    %2253 = vmatprep.mubr.bf16.mxu0 %v791
    %2254 = vmatmul.mubr.bf16.gmra.mrb[0].mxu0 %v790
    %v2255 = vpop.f32.mrb[0].mxu0
    %v2256 = vadd.f32 %v2063, %v2255
    %v2257 = vpop.f32.mrb[0].mxu0
    %v2258 = vadd.f32 %v2065, %v2257
    %v2259 = vpop.f32.mrb[0].mxu0
    %v2260 = vadd.f32 %v2067, %v2259
    %v2261 = vpop.f32.mrb[0].mxu0
    %v2262 = vadd.f32 %v2069, %v2261
    %2263 = vmatprep.mubr.bf16.mxu0 %v795
    %2264 = vmatmul.mubr.bf16.gmra.mrb[0].mxu0 %v794
    %v2265 = vpop.f32.mrb[0].mxu0
    %v2266 = vadd.f32 %v2073, %v2265
    %v2267 = vpop.f32.mrb[0].mxu0
    %v2268 = vadd.f32 %v2075, %v2267
    %v2269 = vpop.f32.mrb[0].mxu0
    %v2270 = vadd.f32 %v2077, %v2269
    %v2271 = vpop.f32.mrb[0].mxu0
    %v2272 = vadd.f32 %v2079, %v2271
    %2273 = vmatprep.mubr.bf16.mxu0 %v799
    %2274 = vmatmul.mubr.bf16.gmra.mrb[0].mxu0 %v798
    %v2275 = vpop.f32.mrb[0].mxu0
    %v2276 = vadd.f32 %v2083, %v2275
    %v2277 = vpop.f32.mrb[0].mxu0
    %v2278 = vadd.f32 %v2085, %v2277
    %v2279 = vpop.f32.mrb[0].mxu0
    %v2280 = vadd.f32 %v2087, %v2279
    %v2281 = vpop.f32.mrb[0].mxu0
    %v2282 = vadd.f32 %v2089, %v2281
    %2283 = vmatprep.mubr.bf16.mxu0 %v803
    %2284 = vmatmul.mubr.bf16.gmra.mrb[0].mxu0 %v802
    %v2285 = vpop.f32.mrb[0].mxu0
    %v2286 = vadd.f32 %v2093, %v2285
    %v2287 = vpop.f32.mrb[0].mxu0
    %v2288 = vadd.f32 %v2095, %v2287
    %v2289 = vpop.f32.mrb[0].mxu0
    %v2290 = vadd.f32 %v2097, %v2289
    %v2291 = vpop.f32.mrb[0].mxu0
    %v2292 = vadd.f32 %v2099, %v2291
    %2293 = vmatprep.mubr.bf16.mxu0 %v807
    %2294 = vmatmul.mubr.bf16.gmra.mrb[0].mxu0 %v806
    %v2295 = vpop.f32.mrb[0].mxu0
    %v2296 = vadd.f32 %v2103, %v2295
    %v2297 = vpop.f32.mrb[0].mxu0
    %v2298 = vadd.f32 %v2105, %v2297
    %v2299 = vpop.f32.mrb[0].mxu0
    %v2300 = vadd.f32 %v2107, %v2299
    %v2301 = vpop.f32.mrb[0].mxu0
    %v2302 = vadd.f32 %v2109, %v2301
    %2303 = vmatprep.mubr.bf16.mxu0 %v811
    %2304 = vmatmul.mubr.bf16.gmra.mrb[0].mxu0 %v810
    %v2305 = vpop.f32.mrb[0].mxu0
    %v2306 = vadd.f32 %v2113, %v2305
    %v2307 = vpop.f32.mrb[0].mxu0
    %v2308 = vadd.f32 %v2115, %v2307
    %v2309 = vpop.f32.mrb[0].mxu0
    %v2310 = vadd.f32 %v2117, %v2309
    %v2311 = vpop.f32.mrb[0].mxu0
    %v2312 = vadd.f32 %v2119, %v2311
    %2313 = vmatprep.mubr.bf16.mxu0 %v815
    %2314 = vmatmul.mubr.bf16.gmra.mrb[0].mxu0 %v814
    %v2315 = vpop.f32.mrb[0].mxu0
    %v2316 = vadd.f32 %v2123, %v2315
    %v2317 = vpop.f32.mrb[0].mxu0
    %v2318 = vadd.f32 %v2125, %v2317
    %v2319 = vpop.f32.mrb[0].mxu0
    %v2320 = vadd.f32 %v2127, %v2319
    %v2321 = vpop.f32.mrb[0].mxu0
    %v2322 = vadd.f32 %v2129, %v2321
    %2323 = vmatprep.mubr.bf16.mxu0 %v819
    %2324 = vmatmul.mubr.bf16.gmra.mrb[0].mxu0 %v818
    %v2325 = vpop.f32.mrb[0].mxu0
    %v2326 = vadd.f32 %v2133, %v2325
    %v2327 = vpop.f32.mrb[0].mxu0
    %v2328 = vadd.f32 %v2135, %v2327
    %v2329 = vpop.f32.mrb[0].mxu0
    %v2330 = vadd.f32 %v2137, %v2329
    %v2331 = vpop.f32.mrb[0].mxu0
    %v2332 = vadd.f32 %v2139, %v2331
    %2333 = vmatprep.mubr.bf16.mxu0 %v823
    %2334 = vmatmul.mubr.bf16.gmra.mrb[0].mxu0 %v822
    %v2335 = vpop.f32.mrb[0].mxu0
    %v2336 = vadd.f32 %v2143, %v2335
    %v2337 = vpop.f32.mrb[0].mxu0
    %v2338 = vadd.f32 %v2145, %v2337
    %v2339 = vpop.f32.mrb[0].mxu0
    %v2340 = vadd.f32 %v2147, %v2339
    %v2341 = vpop.f32.mrb[0].mxu0
    %v2342 = vadd.f32 %v2149, %v2341
    %2343 = vmatprep.mubr.bf16.mxu0 %v827
    %2344 = vmatmul.mubr.bf16.gmra.mrb[0].mxu0 %v826
    %v2345 = vpop.f32.mrb[0].mxu0
    %v2346 = vadd.f32 %v2153, %v2345
    %v2347 = vpop.f32.mrb[0].mxu0
    %v2348 = vadd.f32 %v2155, %v2347
    %v2349 = vpop.f32.mrb[0].mxu0
    %v2350 = vadd.f32 %v2157, %v2349
    %v2351 = vpop.f32.mrb[0].mxu0
    %v2352 = vadd.f32 %v2159, %v2351
    %2353 = vmatprep.mubr.bf16.mxu0 %v831
    %2354 = vmatmul.mubr.bf16.gmra.mrb[0].mxu0 %v830
    %v2355 = vpop.f32.mrb[0].mxu0
    %v2356 = vadd.f32 %v2163, %v2355
    %v2357 = vpop.f32.mrb[0].mxu0
    %v2358 = vadd.f32 %v2165, %v2357
    %v2359 = vpop.f32.mrb[0].mxu0
    %v2360 = vadd.f32 %v2167, %v2359
    %v2361 = vpop.f32.mrb[0].mxu0
    %v2362 = vadd.f32 %v2169, %v2361
    %2363 = vmatprep.mubr.bf16.mxu0 %v835
    %2364 = vmatmul.mubr.bf16.gmra.mrb[0].mxu0 %v834
    %v2365 = vpop.f32.mrb[0].mxu0
    %v2366 = vadd.f32 %v2173, %v2365
    %v2367 = vpop.f32.mrb[0].mxu0
    %v2368 = vadd.f32 %v2175, %v2367
    %v2369 = vpop.f32.mrb[0].mxu0
    %v2370 = vadd.f32 %v2177, %v2369
    %v2371 = vpop.f32.mrb[0].mxu0
    %v2372 = vadd.f32 %v2179, %v2371
    %2373 = vmatprep.mubr.bf16.mxu0 %v839
    %2374 = vmatmul.mubr.bf16.gmra.mrb[0].mxu0 %v838
    %v2375 = vpop.f32.mrb[0].mxu0
    %v2376 = vadd.f32 %v2183, %v2375
    %v2377 = vpop.f32.mrb[0].mxu0
    %v2378 = vadd.f32 %v2185, %v2377
    %v2379 = vpop.f32.mrb[0].mxu0
    %v2380 = vadd.f32 %v2187, %v2379
    %v2381 = vpop.f32.mrb[0].mxu0
    %v2382 = vadd.f32 %v2189, %v2381
    %2383 = vmatprep.mubr.bf16.mxu0 %v843
    %2384 = vmatmul.mubr.bf16.gmra.mrb[0].mxu0 %v842
    %v2385 = vpop.f32.mrb[0].mxu0
    %v2386 = vadd.f32 %v2193, %v2385
    %v2387 = vpop.f32.mrb[0].mxu0
    %v2388 = vadd.f32 %v2195, %v2387
    %v2389 = vpop.f32.mrb[0].mxu0
    %v2390 = vadd.f32 %v2197, %v2389
    %v2391 = vpop.f32.mrb[0].mxu0
    %v2392 = vadd.f32 %v2199, %v2391
    %2393 = vmatprep.mubr.bf16.mxu0 %v847
    %2394 = vmatmul.mubr.bf16.gmra.mrb[0].mxu0 %v846
    %v2395 = vpop.f32.mrb[0].mxu0
    %v2396 = vadd.f32 %v2203, %v2395
    %v2397 = vpop.f32.mrb[0].mxu0
    %v2398 = vadd.f32 %v2205, %v2397
    %v2399 = vpop.f32.mrb[0].mxu0
    %v2400 = vadd.f32 %v2207, %v2399
    %v2401 = vpop.f32.mrb[0].mxu0
    %v2402 = vadd.f32 %v2209, %v2401
    %2403 = vmatprep.mubr.bf16.mxu0 %v851
    %2404 = vmatmul.mubr.bf16.gmra.mrb[0].mxu0 %v850
    %v2405 = vpop.f32.mrb[0].mxu0
    %v2406 = vadd.f32 %v2213, %v2405
    %v2407 = vpop.f32.mrb[0].mxu0
    %v2408 = vadd.f32 %v2215, %v2407
    %v2409 = vpop.f32.mrb[0].mxu0
    %v2410 = vadd.f32 %v2217, %v2409
    %v2411 = vpop.f32.mrb[0].mxu0
    %v2412 = vadd.f32 %v2219, %v2411
    %2413 = vdwg.mxu0
    %v2414 = vmax.f32 %v1870, 0.0
    %v2415 = vmax.f32 %v1872, 0.0
    %v2416 = vmax.f32 %v2256, 0.0
    %v2417 = vmax.f32 %v2258, 0.0
    %v2418 = vmax.f32 %v1874, 0.0
    %v2419 = vmax.f32 %v1876, 0.0
    %v2420 = vmax.f32 %v2260, 0.0
    %v2421 = vmax.f32 %v2262, 0.0
    %v2422 = vmax.f32 %v1880, 0.0
    %v2423 = vmax.f32 %v1882, 0.0
    %v2424 = vmax.f32 %v2266, 0.0
    %v2425 = vmax.f32 %v2268, 0.0
    %v2426 = vmax.f32 %v1884, 0.0
    %v2427 = vmax.f32 %v1886, 0.0
    %v2428 = vmax.f32 %v2270, 0.0
    %v2429 = vmax.f32 %v2272, 0.0
    %v2430 = vmax.f32 %v1890, 0.0
    %v2431 = vmax.f32 %v1892, 0.0
    %v2432 = vmax.f32 %v2276, 0.0
    %v2433 = vmax.f32 %v2278, 0.0
    %v2434 = vmax.f32 %v1894, 0.0
    %v2435 = vmax.f32 %v1896, 0.0
    %v2436 = vmax.f32 %v2280, 0.0
    %v2437 = vmax.f32 %v2282, 0.0
    %v2438 = vmax.f32 %v1900, 0.0
    %v2439 = vmax.f32 %v1902, 0.0
    %v2440 = vmax.f32 %v2286, 0.0
    %v2441 = vmax.f32 %v2288, 0.0
    %v2442 = vmax.f32 %v1904, 0.0
    %v2443 = vmax.f32 %v1906, 0.0
    %v2444 = vmax.f32 %v2290, 0.0
    %v2445 = vmax.f32 %v2292, 0.0
    %v2446 = vmax.f32 %v1910, 0.0
    %v2447 = vmax.f32 %v1912, 0.0
    %v2448 = vmax.f32 %v2296, 0.0
    %v2449 = vmax.f32 %v2298, 0.0
    %v2450 = vmax.f32 %v1914, 0.0
    %v2451 = vmax.f32 %v1916, 0.0
    %v2452 = vmax.f32 %v2300, 0.0
    %v2453 = vmax.f32 %v2302, 0.0
    %v2454 = vmax.f32 %v1920, 0.0
    %v2455 = vmax.f32 %v1922, 0.0
    %v2456 = vmax.f32 %v2306, 0.0
    %v2457 = vmax.f32 %v2308, 0.0
    %v2458 = vmax.f32 %v1924, 0.0
    %v2459 = vmax.f32 %v1926, 0.0
    %v2460 = vmax.f32 %v2310, 0.0
    %v2461 = vmax.f32 %v2312, 0.0
    %v2462 = vmax.f32 %v1930, 0.0
    %v2463 = vmax.f32 %v1932, 0.0
    %v2464 = vmax.f32 %v2316, 0.0
    %v2465 = vmax.f32 %v2318, 0.0
    %v2466 = vmax.f32 %v1934, 0.0
    %v2467 = vmax.f32 %v1936, 0.0
    %v2468 = vmax.f32 %v2320, 0.0
    %v2469 = vmax.f32 %v2322, 0.0
    %v2470 = vmax.f32 %v1940, 0.0
    %v2471 = vmax.f32 %v1942, 0.0
    %v2472 = vmax.f32 %v2326, 0.0
    %v2473 = vmax.f32 %v2328, 0.0
    %v2474 = vmax.f32 %v1944, 0.0
    %v2475 = vmax.f32 %v1946, 0.0
    %v2476 = vmax.f32 %v2330, 0.0
    %v2477 = vmax.f32 %v2332, 0.0
    %v2478 = vmax.f32 %v1950, 0.0
    %v2479 = vmax.f32 %v1952, 0.0
    %v2480 = vmax.f32 %v2336, 0.0
    %v2481 = vmax.f32 %v2338, 0.0
    %v2482 = vmax.f32 %v1954, 0.0
    %v2483 = vmax.f32 %v1956, 0.0
    %v2484 = vmax.f32 %v2340, 0.0
    %v2485 = vmax.f32 %v2342, 0.0
    %v2486 = vmax.f32 %v1960, 0.0
    %v2487 = vmax.f32 %v1962, 0.0
    %v2488 = vmax.f32 %v2346, 0.0
    %v2489 = vmax.f32 %v2348, 0.0
    %v2490 = vmax.f32 %v1964, 0.0
    %v2491 = vmax.f32 %v1966, 0.0
    %v2492 = vmax.f32 %v2350, 0.0
    %v2493 = vmax.f32 %v2352, 0.0
    %v2494 = vmax.f32 %v1970, 0.0
    %v2495 = vmax.f32 %v1972, 0.0
    %v2496 = vmax.f32 %v2356, 0.0
    %v2497 = vmax.f32 %v2358, 0.0
    %v2498 = vmax.f32 %v1974, 0.0
    %v2499 = vmax.f32 %v1976, 0.0
    %v2500 = vmax.f32 %v2360, 0.0
    %v2501 = vmax.f32 %v2362, 0.0
    %v2502 = vmax.f32 %v1980, 0.0
    %v2503 = vmax.f32 %v1982, 0.0
    %v2504 = vmax.f32 %v2366, 0.0
    %v2505 = vmax.f32 %v2368, 0.0
    %v2506 = vmax.f32 %v1984, 0.0
    %v2507 = vmax.f32 %v1986, 0.0
    %v2508 = vmax.f32 %v2370, 0.0
    %v2509 = vmax.f32 %v2372, 0.0
    %v2510 = vmax.f32 %v1990, 0.0
    %v2511 = vmax.f32 %v1992, 0.0
    %v2512 = vmax.f32 %v2376, 0.0
    %v2513 = vmax.f32 %v2378, 0.0
    %v2514 = vmax.f32 %v1994, 0.0
    %v2515 = vmax.f32 %v1996, 0.0
    %v2516 = vmax.f32 %v2380, 0.0
    %v2517 = vmax.f32 %v2382, 0.0
    %v2518 = vmax.f32 %v2000, 0.0
    %v2519 = vmax.f32 %v2002, 0.0
    %v2520 = vmax.f32 %v2386, 0.0
    %v2521 = vmax.f32 %v2388, 0.0
    %v2522 = vmax.f32 %v2004, 0.0
    %v2523 = vmax.f32 %v2006, 0.0
    %v2524 = vmax.f32 %v2390, 0.0
    %v2525 = vmax.f32 %v2392, 0.0
    %v2526 = vmax.f32 %v2010, 0.0
    %v2527 = vmax.f32 %v2012, 0.0
    %v2528 = vmax.f32 %v2396, 0.0
    %v2529 = vmax.f32 %v2398, 0.0
    %v2530 = vmax.f32 %v2014, 0.0
    %v2531 = vmax.f32 %v2016, 0.0
    %v2532 = vmax.f32 %v2400, 0.0
    %v2533 = vmax.f32 %v2402, 0.0
    %v2534 = vmax.f32 %v2020, 0.0
    %v2535 = vmax.f32 %v2022, 0.0
    %v2536 = vmax.f32 %v2406, 0.0
    %v2537 = vmax.f32 %v2408, 0.0
    %v2538 = vmax.f32 %v2024, 0.0
    %v2539 = vmax.f32 %v2026, 0.0
    %v2540 = vmax.f32 %v2410, 0.0
    %v2541 = vmax.f32 %v2412, 0.0
    %v2542 = vld [vmem:[%s5] sm:$0xf]
    %v2544 = vlaneseq
    %v2545 = vshrl.u32 %v2544, 7
    %v2546 = vsub.s32 0, %v2545
    %v2547 = vrot.slane %v2542, %v2546
    %v2548 = vlaneseq
    %v2549 = vshrl.u32 %v2548, 7
    %v2550 = vsub.s32 1, %v2549
    %v2551 = vrot.slane %v2542, %v2550
    %v2552 = vlaneseq
    %v2553 = vshrl.u32 %v2552, 7
    %v2554 = vsub.s32 2, %v2553
    %v2555 = vrot.slane %v2542, %v2554
    %v2556 = vlaneseq
    %v2557 = vshrl.u32 %v2556, 7
    %v2558 = vsub.s32 3, %v2557
    %v2559 = vrot.slane %v2542, %v2558
    %v2564 = vmul.f32 %v2414, %v2547
    %v2565 = vmul.f32 %v2415, %v2551
    %v2566 = vmul.f32 %v2416, %v2555
    %v2567 = vmul.f32 %v2417, %v2559
    %v2568 = vmul.f32 %v2418, %v2547
    %v2569 = vmul.f32 %v2419, %v2551
    %v2570 = vmul.f32 %v2420, %v2555
    %v2571 = vmul.f32 %v2421, %v2559
    %v2572 = vmul.f32 %v2422, %v2547
    %v2573 = vmul.f32 %v2423, %v2551
    %v2574 = vmul.f32 %v2424, %v2555
    %v2575 = vmul.f32 %v2425, %v2559
    %v2576 = vmul.f32 %v2426, %v2547
    %v2577 = vmul.f32 %v2427, %v2551
    %v2578 = vmul.f32 %v2428, %v2555
    %v2579 = vmul.f32 %v2429, %v2559
    %v2580 = vmul.f32 %v2430, %v2547
    %v2581 = vmul.f32 %v2431, %v2551
    %v2582 = vmul.f32 %v2432, %v2555
    %v2583 = vmul.f32 %v2433, %v2559
    %v2584 = vmul.f32 %v2434, %v2547
    %v2585 = vmul.f32 %v2435, %v2551
    %v2586 = vmul.f32 %v2436, %v2555
    %v2587 = vmul.f32 %v2437, %v2559
    %v2588 = vmul.f32 %v2438, %v2547
    %v2589 = vmul.f32 %v2439, %v2551
    %v2590 = vmul.f32 %v2440, %v2555
    %v2591 = vmul.f32 %v2441, %v2559
    %v2592 = vmul.f32 %v2442, %v2547
    %v2593 = vmul.f32 %v2443, %v2551
    %v2594 = vmul.f32 %v2444, %v2555
    %v2595 = vmul.f32 %v2445, %v2559
    %v2596 = vmul.f32 %v2446, %v2547
    %v2597 = vmul.f32 %v2447, %v2551
    %v2598 = vmul.f32 %v2448, %v2555
    %v2599 = vmul.f32 %v2449, %v2559
    %v2600 = vmul.f32 %v2450, %v2547
    %v2601 = vmul.f32 %v2451, %v2551
    %v2602 = vmul.f32 %v2452, %v2555
    %v2603 = vmul.f32 %v2453, %v2559
    %v2604 = vmul.f32 %v2454, %v2547
    %v2605 = vmul.f32 %v2455, %v2551
    %v2606 = vmul.f32 %v2456, %v2555
    %v2607 = vmul.f32 %v2457, %v2559
    %v2608 = vmul.f32 %v2458, %v2547
    %v2609 = vmul.f32 %v2459, %v2551
    %v2610 = vmul.f32 %v2460, %v2555
    %v2611 = vmul.f32 %v2461, %v2559
    %v2612 = vmul.f32 %v2462, %v2547
    %v2613 = vmul.f32 %v2463, %v2551
    %v2614 = vmul.f32 %v2464, %v2555
    %v2615 = vmul.f32 %v2465, %v2559
    %v2616 = vmul.f32 %v2466, %v2547
    %v2617 = vmul.f32 %v2467, %v2551
    %v2618 = vmul.f32 %v2468, %v2555
    %v2619 = vmul.f32 %v2469, %v2559
    %v2620 = vmul.f32 %v2470, %v2547
    %v2621 = vmul.f32 %v2471, %v2551
    %v2622 = vmul.f32 %v2472, %v2555
    %v2623 = vmul.f32 %v2473, %v2559
    %v2624 = vmul.f32 %v2474, %v2547
    %v2625 = vmul.f32 %v2475, %v2551
    %v2626 = vmul.f32 %v2476, %v2555
    %v2627 = vmul.f32 %v2477, %v2559
    %v2628 = vmul.f32 %v2478, %v2547
    %v2629 = vmul.f32 %v2479, %v2551
    %v2630 = vmul.f32 %v2480, %v2555
    %v2631 = vmul.f32 %v2481, %v2559
    %v2632 = vmul.f32 %v2482, %v2547
    %v2633 = vmul.f32 %v2483, %v2551
    %v2634 = vmul.f32 %v2484, %v2555
    %v2635 = vmul.f32 %v2485, %v2559
    %v2636 = vmul.f32 %v2486, %v2547
    %v2637 = vmul.f32 %v2487, %v2551
    %v2638 = vmul.f32 %v2488, %v2555
    %v2639 = vmul.f32 %v2489, %v2559
    %v2640 = vmul.f32 %v2490, %v2547
    %v2641 = vmul.f32 %v2491, %v2551
    %v2642 = vmul.f32 %v2492, %v2555
    %v2643 = vmul.f32 %v2493, %v2559
    %v2644 = vmul.f32 %v2494, %v2547
    %v2645 = vmul.f32 %v2495, %v2551
    %v2646 = vmul.f32 %v2496, %v2555
    %v2647 = vmul.f32 %v2497, %v2559
    %v2648 = vmul.f32 %v2498, %v2547
    %v2649 = vmul.f32 %v2499, %v2551
    %v2650 = vmul.f32 %v2500, %v2555
    %v2651 = vmul.f32 %v2501, %v2559
    %v2652 = vmul.f32 %v2502, %v2547
    %v2653 = vmul.f32 %v2503, %v2551
    %v2654 = vmul.f32 %v2504, %v2555
    %v2655 = vmul.f32 %v2505, %v2559
    %v2656 = vmul.f32 %v2506, %v2547
    %v2657 = vmul.f32 %v2507, %v2551
    %v2658 = vmul.f32 %v2508, %v2555
    %v2659 = vmul.f32 %v2509, %v2559
    %v2660 = vmul.f32 %v2510, %v2547
    %v2661 = vmul.f32 %v2511, %v2551
    %v2662 = vmul.f32 %v2512, %v2555
    %v2663 = vmul.f32 %v2513, %v2559
    %v2664 = vmul.f32 %v2514, %v2547
    %v2665 = vmul.f32 %v2515, %v2551
    %v2666 = vmul.f32 %v2516, %v2555
    %v2667 = vmul.f32 %v2517, %v2559
    %v2668 = vmul.f32 %v2518, %v2547
    %v2669 = vmul.f32 %v2519, %v2551
    %v2670 = vmul.f32 %v2520, %v2555
    %v2671 = vmul.f32 %v2521, %v2559
    %v2672 = vmul.f32 %v2522, %v2547
    %v2673 = vmul.f32 %v2523, %v2551
    %v2674 = vmul.f32 %v2524, %v2555
    %v2675 = vmul.f32 %v2525, %v2559
    %v2676 = vmul.f32 %v2526, %v2547
    %v2677 = vmul.f32 %v2527, %v2551
    %v2678 = vmul.f32 %v2528, %v2555
    %v2679 = vmul.f32 %v2529, %v2559
    %v2680 = vmul.f32 %v2530, %v2547
    %v2681 = vmul.f32 %v2531, %v2551
    %v2682 = vmul.f32 %v2532, %v2555
    %v2683 = vmul.f32 %v2533, %v2559
    %v2684 = vmul.f32 %v2534, %v2547
    %v2685 = vmul.f32 %v2535, %v2551
    %v2686 = vmul.f32 %v2536, %v2555
    %v2687 = vmul.f32 %v2537, %v2559
    %v2688 = vmul.f32 %v2538, %v2547
    %v2689 = vmul.f32 %v2539, %v2551
    %v2690 = vmul.f32 %v2540, %v2555
    %v2691 = vmul.f32 %v2541, %v2559
    %v2692 = vadd.f32 %v2564, %v2565
    %v2693 = vadd.f32 %v2692, %v2566
    %v2694 = vadd.f32 %v2693, %v2567
    %2695 = vadd.xlane.f32.xlu0 %v2694
    %v2696 = vpop.xlane.xlu0 %2695
    %v2697 = vadd.f32 %v2568, %v2569
    %v2698 = vadd.f32 %v2697, %v2570
    %v2699 = vadd.f32 %v2698, %v2571
    %2700 = vadd.xlane.f32.xlu0 %v2699
    %v2701 = vpop.xlane.xlu0 %2700
    %v2702 = vadd.f32 %v2572, %v2573
    %v2703 = vadd.f32 %v2702, %v2574
    %v2704 = vadd.f32 %v2703, %v2575
    %2705 = vadd.xlane.f32.xlu0 %v2704
    %v2706 = vpop.xlane.xlu0 %2705
    %v2707 = vadd.f32 %v2576, %v2577
    %v2708 = vadd.f32 %v2707, %v2578
    %v2709 = vadd.f32 %v2708, %v2579
    %2710 = vadd.xlane.f32.xlu0 %v2709
    %v2711 = vpop.xlane.xlu0 %2710
    %v2712 = vadd.f32 %v2580, %v2581
    %v2713 = vadd.f32 %v2712, %v2582
    %v2714 = vadd.f32 %v2713, %v2583
    %2715 = vadd.xlane.f32.xlu0 %v2714
    %v2716 = vpop.xlane.xlu0 %2715
    %v2717 = vadd.f32 %v2584, %v2585
    %v2718 = vadd.f32 %v2717, %v2586
    %v2719 = vadd.f32 %v2718, %v2587
    %2720 = vadd.xlane.f32.xlu0 %v2719
    %v2721 = vpop.xlane.xlu0 %2720
    %v2722 = vadd.f32 %v2588, %v2589
    %v2723 = vadd.f32 %v2722, %v2590
    %v2724 = vadd.f32 %v2723, %v2591
    %2725 = vadd.xlane.f32.xlu0 %v2724
    %v2726 = vpop.xlane.xlu0 %2725
    %v2727 = vadd.f32 %v2592, %v2593
    %v2728 = vadd.f32 %v2727, %v2594
    %v2729 = vadd.f32 %v2728, %v2595
    %2730 = vadd.xlane.f32.xlu0 %v2729
    %v2731 = vpop.xlane.xlu0 %2730
    %v2732 = vadd.f32 %v2596, %v2597
    %v2733 = vadd.f32 %v2732, %v2598
    %v2734 = vadd.f32 %v2733, %v2599
    %2735 = vadd.xlane.f32.xlu0 %v2734
    %v2736 = vpop.xlane.xlu0 %2735
    %v2737 = vadd.f32 %v2600, %v2601
    %v2738 = vadd.f32 %v2737, %v2602
    %v2739 = vadd.f32 %v2738, %v2603
    %2740 = vadd.xlane.f32.xlu0 %v2739
    %v2741 = vpop.xlane.xlu0 %2740
    %v2742 = vadd.f32 %v2604, %v2605
    %v2743 = vadd.f32 %v2742, %v2606
    %v2744 = vadd.f32 %v2743, %v2607
    %2745 = vadd.xlane.f32.xlu0 %v2744
    %v2746 = vpop.xlane.xlu0 %2745
    %v2747 = vadd.f32 %v2608, %v2609
    %v2748 = vadd.f32 %v2747, %v2610
    %v2749 = vadd.f32 %v2748, %v2611
    %2750 = vadd.xlane.f32.xlu0 %v2749
    %v2751 = vpop.xlane.xlu0 %2750
    %v2752 = vadd.f32 %v2612, %v2613
    %v2753 = vadd.f32 %v2752, %v2614
    %v2754 = vadd.f32 %v2753, %v2615
    %2755 = vadd.xlane.f32.xlu0 %v2754
    %v2756 = vpop.xlane.xlu0 %2755
    %v2757 = vadd.f32 %v2616, %v2617
    %v2758 = vadd.f32 %v2757, %v2618
    %v2759 = vadd.f32 %v2758, %v2619
    %2760 = vadd.xlane.f32.xlu0 %v2759
    %v2761 = vpop.xlane.xlu0 %2760
    %v2762 = vadd.f32 %v2620, %v2621
    %v2763 = vadd.f32 %v2762, %v2622
    %v2764 = vadd.f32 %v2763, %v2623
    %2765 = vadd.xlane.f32.xlu0 %v2764
    %v2766 = vpop.xlane.xlu0 %2765
    %v2767 = vadd.f32 %v2624, %v2625
    %v2768 = vadd.f32 %v2767, %v2626
    %v2769 = vadd.f32 %v2768, %v2627
    %2770 = vadd.xlane.f32.xlu0 %v2769
    %v2771 = vpop.xlane.xlu0 %2770
    %v2772 = vadd.f32 %v2628, %v2629
    %v2773 = vadd.f32 %v2772, %v2630
    %v2774 = vadd.f32 %v2773, %v2631
    %2775 = vadd.xlane.f32.xlu0 %v2774
    %v2776 = vpop.xlane.xlu0 %2775
    %v2777 = vadd.f32 %v2632, %v2633
    %v2778 = vadd.f32 %v2777, %v2634
    %v2779 = vadd.f32 %v2778, %v2635
    %2780 = vadd.xlane.f32.xlu0 %v2779
    %v2781 = vpop.xlane.xlu0 %2780
    %v2782 = vadd.f32 %v2636, %v2637
    %v2783 = vadd.f32 %v2782, %v2638
    %v2784 = vadd.f32 %v2783, %v2639
    %2785 = vadd.xlane.f32.xlu0 %v2784
    %v2786 = vpop.xlane.xlu0 %2785
    %v2787 = vadd.f32 %v2640, %v2641
    %v2788 = vadd.f32 %v2787, %v2642
    %v2789 = vadd.f32 %v2788, %v2643
    %2790 = vadd.xlane.f32.xlu0 %v2789
    %v2791 = vpop.xlane.xlu0 %2790
    %v2792 = vadd.f32 %v2644, %v2645
    %v2793 = vadd.f32 %v2792, %v2646
    %v2794 = vadd.f32 %v2793, %v2647
    %2795 = vadd.xlane.f32.xlu0 %v2794
    %v2796 = vpop.xlane.xlu0 %2795
    %v2797 = vadd.f32 %v2648, %v2649
    %v2798 = vadd.f32 %v2797, %v2650
    %v2799 = vadd.f32 %v2798, %v2651
    %2800 = vadd.xlane.f32.xlu0 %v2799
    %v2801 = vpop.xlane.xlu0 %2800
    %v2802 = vadd.f32 %v2652, %v2653
    %v2803 = vadd.f32 %v2802, %v2654
    %v2804 = vadd.f32 %v2803, %v2655
    %2805 = vadd.xlane.f32.xlu0 %v2804
    %v2806 = vpop.xlane.xlu0 %2805
    %v2807 = vadd.f32 %v2656, %v2657
    %v2808 = vadd.f32 %v2807, %v2658
    %v2809 = vadd.f32 %v2808, %v2659
    %2810 = vadd.xlane.f32.xlu0 %v2809
    %v2811 = vpop.xlane.xlu0 %2810
    %v2812 = vadd.f32 %v2660, %v2661
    %v2813 = vadd.f32 %v2812, %v2662
    %v2814 = vadd.f32 %v2813, %v2663
    %2815 = vadd.xlane.f32.xlu0 %v2814
    %v2816 = vpop.xlane.xlu0 %2815
    %v2817 = vadd.f32 %v2664, %v2665
    %v2818 = vadd.f32 %v2817, %v2666
    %v2819 = vadd.f32 %v2818, %v2667
    %2820 = vadd.xlane.f32.xlu0 %v2819
    %v2821 = vpop.xlane.xlu0 %2820
    %v2822 = vadd.f32 %v2668, %v2669
    %v2823 = vadd.f32 %v2822, %v2670
    %v2824 = vadd.f32 %v2823, %v2671
    %2825 = vadd.xlane.f32.xlu0 %v2824
    %v2826 = vpop.xlane.xlu0 %2825
    %v2827 = vadd.f32 %v2672, %v2673
    %v2828 = vadd.f32 %v2827, %v2674
    %v2829 = vadd.f32 %v2828, %v2675
    %2830 = vadd.xlane.f32.xlu0 %v2829
    %v2831 = vpop.xlane.xlu0 %2830
    %v2832 = vadd.f32 %v2676, %v2677
    %v2833 = vadd.f32 %v2832, %v2678
    %v2834 = vadd.f32 %v2833, %v2679
    %2835 = vadd.xlane.f32.xlu0 %v2834
    %v2836 = vpop.xlane.xlu0 %2835
    %v2837 = vadd.f32 %v2680, %v2681
    %v2838 = vadd.f32 %v2837, %v2682
    %v2839 = vadd.f32 %v2838, %v2683
    %2840 = vadd.xlane.f32.xlu0 %v2839
    %v2841 = vpop.xlane.xlu0 %2840
    %v2842 = vadd.f32 %v2684, %v2685
    %v2843 = vadd.f32 %v2842, %v2686
    %v2844 = vadd.f32 %v2843, %v2687
    %2845 = vadd.xlane.f32.xlu0 %v2844
    %v2846 = vpop.xlane.xlu0 %2845
    %v2847 = vadd.f32 %v2688, %v2689
    %v2848 = vadd.f32 %v2847, %v2690
    %v2849 = vadd.f32 %v2848, %v2691
    %2850 = vadd.xlane.f32.xlu0 %v2849
    %v2851 = vpop.xlane.xlu0 %2850
    %v2852 = vld [vmem:[#allocation2] sm:$0x1]
    %v2854 = vlaneseq
    %v2855 = vshrl.u32 %v2854, 7
    %v2856 = vsub.s32 0, %v2855
    %v2857 = vrot.slane %v2852, %v2856
    %v2859 = vadd.f32 %v2696, %v2857
    %v2860 = vadd.f32 %v2701, %v2857
    %v2861 = vadd.f32 %v2706, %v2857
    %v2862 = vadd.f32 %v2711, %v2857
    %v2863 = vadd.f32 %v2716, %v2857
    %v2864 = vadd.f32 %v2721, %v2857
    %v2865 = vadd.f32 %v2726, %v2857
    %v2866 = vadd.f32 %v2731, %v2857
    %v2867 = vadd.f32 %v2736, %v2857
    %v2868 = vadd.f32 %v2741, %v2857
    %v2869 = vadd.f32 %v2746, %v2857
    %v2870 = vadd.f32 %v2751, %v2857
    %v2871 = vadd.f32 %v2756, %v2857
    %v2872 = vadd.f32 %v2761, %v2857
    %v2873 = vadd.f32 %v2766, %v2857
    %v2874 = vadd.f32 %v2771, %v2857
    %v2875 = vadd.f32 %v2776, %v2857
    %v2876 = vadd.f32 %v2781, %v2857
    %v2877 = vadd.f32 %v2786, %v2857
    %v2878 = vadd.f32 %v2791, %v2857
    %v2879 = vadd.f32 %v2796, %v2857
    %v2880 = vadd.f32 %v2801, %v2857
    %v2881 = vadd.f32 %v2806, %v2857
    %v2882 = vadd.f32 %v2811, %v2857
    %v2883 = vadd.f32 %v2816, %v2857
    %v2884 = vadd.f32 %v2821, %v2857
    %v2885 = vadd.f32 %v2826, %v2857
    %v2886 = vadd.f32 %v2831, %v2857
    %v2887 = vadd.f32 %v2836, %v2857
    %v2888 = vadd.f32 %v2841, %v2857
    %v2889 = vadd.f32 %v2846, %v2857
    %v2890 = vadd.f32 %v2851, %v2857
    %v2891 = vxor.u32 %v2859, 2147483648
    %v2892 = vxor.u32 %v2860, 2147483648
    %v2893 = vxor.u32 %v2861, 2147483648
    %v2894 = vxor.u32 %v2862, 2147483648
    %v2895 = vxor.u32 %v2863, 2147483648
    %v2896 = vxor.u32 %v2864, 2147483648
    %v2897 = vxor.u32 %v2865, 2147483648
    %v2898 = vxor.u32 %v2866, 2147483648
    %v2899 = vxor.u32 %v2867, 2147483648
    %v2900 = vxor.u32 %v2868, 2147483648
    %v2901 = vxor.u32 %v2869, 2147483648
    %v2902 = vxor.u32 %v2870, 2147483648
    %v2903 = vxor.u32 %v2871, 2147483648
    %v2904 = vxor.u32 %v2872, 2147483648
    %v2905 = vxor.u32 %v2873, 2147483648
    %v2906 = vxor.u32 %v2874, 2147483648
    %v2907 = vxor.u32 %v2875, 2147483648
    %v2908 = vxor.u32 %v2876, 2147483648
    %v2909 = vxor.u32 %v2877, 2147483648
    %v2910 = vxor.u32 %v2878, 2147483648
    %v2911 = vxor.u32 %v2879, 2147483648
    %v2912 = vxor.u32 %v2880, 2147483648
    %v2913 = vxor.u32 %v2881, 2147483648
    %v2914 = vxor.u32 %v2882, 2147483648
    %v2915 = vxor.u32 %v2883, 2147483648
    %v2916 = vxor.u32 %v2884, 2147483648
    %v2917 = vxor.u32 %v2885, 2147483648
    %v2918 = vxor.u32 %v2886, 2147483648
    %v2919 = vxor.u32 %v2887, 2147483648
    %v2920 = vxor.u32 %v2888, 2147483648
    %v2921 = vxor.u32 %v2889, 2147483648
    %v2922 = vxor.u32 %v2890, 2147483648
    %v2923 = vmul.f32 %v2891, 1.442695
    %v2924 = vpow.pop %v2923
    %v2925 = vmul.f32 %v2892, 1.442695
    %v2926 = vpow.pop %v2925
    %v2927 = vmul.f32 %v2893, 1.442695
    %v2928 = vpow.pop %v2927
    %v2929 = vmul.f32 %v2894, 1.442695
    %v2930 = vpow.pop %v2929
    %v2931 = vmul.f32 %v2895, 1.442695
    %v2932 = vpow.pop %v2931
    %v2933 = vmul.f32 %v2896, 1.442695
    %v2934 = vpow.pop %v2933
    %v2935 = vmul.f32 %v2897, 1.442695
    %v2936 = vpow.pop %v2935
    %v2937 = vmul.f32 %v2898, 1.442695
    %v2938 = vpow.pop %v2937
    %v2939 = vmul.f32 %v2899, 1.442695
    %v2940 = vpow.pop %v2939
    %v2941 = vmul.f32 %v2900, 1.442695
    %v2942 = vpow.pop %v2941
    %v2943 = vmul.f32 %v2901, 1.442695
    %v2944 = vpow.pop %v2943
    %v2945 = vmul.f32 %v2902, 1.442695
    %v2946 = vpow.pop %v2945
    %v2947 = vmul.f32 %v2903, 1.442695
    %v2948 = vpow.pop %v2947
    %v2949 = vmul.f32 %v2904, 1.442695
    %v2950 = vpow.pop %v2949
    %v2951 = vmul.f32 %v2905, 1.442695
    %v2952 = vpow.pop %v2951
    %v2953 = vmul.f32 %v2906, 1.442695
    %v2954 = vpow.pop %v2953
    %v2955 = vmul.f32 %v2907, 1.442695
    %v2956 = vpow.pop %v2955
    %v2957 = vmul.f32 %v2908, 1.442695
    %v2958 = vpow.pop %v2957
    %v2959 = vmul.f32 %v2909, 1.442695
    %v2960 = vpow.pop %v2959
    %v2961 = vmul.f32 %v2910, 1.442695
    %v2962 = vpow.pop %v2961
    %v2963 = vmul.f32 %v2911, 1.442695
    %v2964 = vpow.pop %v2963
    %v2965 = vmul.f32 %v2912, 1.442695
    %v2966 = vpow.pop %v2965
    %v2967 = vmul.f32 %v2913, 1.442695
    %v2968 = vpow.pop %v2967
    %v2969 = vmul.f32 %v2914, 1.442695
    %v2970 = vpow.pop %v2969
    %v2971 = vmul.f32 %v2915, 1.442695
    %v2972 = vpow.pop %v2971
    %v2973 = vmul.f32 %v2916, 1.442695
    %v2974 = vpow.pop %v2973
    %v2975 = vmul.f32 %v2917, 1.442695
    %v2976 = vpow.pop %v2975
    %v2977 = vmul.f32 %v2918, 1.442695
    %v2978 = vpow.pop %v2977
    %v2979 = vmul.f32 %v2919, 1.442695
    %v2980 = vpow.pop %v2979
    %v2981 = vmul.f32 %v2920, 1.442695
    %v2982 = vpow.pop %v2981
    %v2983 = vmul.f32 %v2921, 1.442695
    %v2984 = vpow.pop %v2983
    %v2985 = vmul.f32 %v2922, 1.442695
    %v2986 = vpow.pop %v2985
    %v2987 = vadd.f32 %v2924, 1.0
    %v2988 = vadd.f32 %v2926, 1.0
    %v2989 = vadd.f32 %v2928, 1.0
    %v2990 = vadd.f32 %v2930, 1.0
    %v2991 = vadd.f32 %v2932, 1.0
    %v2992 = vadd.f32 %v2934, 1.0
    %v2993 = vadd.f32 %v2936, 1.0
    %v2994 = vadd.f32 %v2938, 1.0
    %v2995 = vadd.f32 %v2940, 1.0
    %v2996 = vadd.f32 %v2942, 1.0
    %v2997 = vadd.f32 %v2944, 1.0
    %v2998 = vadd.f32 %v2946, 1.0
    %v2999 = vadd.f32 %v2948, 1.0
    %v3000 = vadd.f32 %v2950, 1.0
    %v3001 = vadd.f32 %v2952, 1.0
    %v3002 = vadd.f32 %v2954, 1.0
    %v3003 = vadd.f32 %v2956, 1.0
    %v3004 = vadd.f32 %v2958, 1.0
    %v3005 = vadd.f32 %v2960, 1.0
    %v3006 = vadd.f32 %v2962, 1.0
    %v3007 = vadd.f32 %v2964, 1.0
    %v3008 = vadd.f32 %v2966, 1.0
    %v3009 = vadd.f32 %v2968, 1.0
    %v3010 = vadd.f32 %v2970, 1.0
    %v3011 = vadd.f32 %v2972, 1.0
    %v3012 = vadd.f32 %v2974, 1.0
    %v3013 = vadd.f32 %v2976, 1.0
    %v3014 = vadd.f32 %v2978, 1.0
    %v3015 = vadd.f32 %v2980, 1.0
    %v3016 = vadd.f32 %v2982, 1.0
    %v3017 = vadd.f32 %v2984, 1.0
    %v3018 = vadd.f32 %v2986, 1.0
    %v3019 = vrcp.pop %v2987
    %v3020 = vmul.f32 1.0, %v3019
    %v3021 = vrcp.pop %v2988
    %v3022 = vmul.f32 1.0, %v3021
    %v3023 = vrcp.pop %v2989
    %v3024 = vmul.f32 1.0, %v3023
    %v3025 = vrcp.pop %v2990
    %v3026 = vmul.f32 1.0, %v3025
    %v3027 = vrcp.pop %v2991
    %v3028 = vmul.f32 1.0, %v3027
    %v3029 = vrcp.pop %v2992
    %v3030 = vmul.f32 1.0, %v3029
    %v3031 = vrcp.pop %v2993
    %v3032 = vmul.f32 1.0, %v3031
    %v3033 = vrcp.pop %v2994
    %v3034 = vmul.f32 1.0, %v3033
    %v3035 = vrcp.pop %v2995
    %v3036 = vmul.f32 1.0, %v3035
    %v3037 = vrcp.pop %v2996
    %v3038 = vmul.f32 1.0, %v3037
    %v3039 = vrcp.pop %v2997
    %v3040 = vmul.f32 1.0, %v3039
    %v3041 = vrcp.pop %v2998
    %v3042 = vmul.f32 1.0, %v3041
    %v3043 = vrcp.pop %v2999
    %v3044 = vmul.f32 1.0, %v3043
    %v3045 = vrcp.pop %v3000
    %v3046 = vmul.f32 1.0, %v3045
    %v3047 = vrcp.pop %v3001
    %v3048 = vmul.f32 1.0, %v3047
    %v3049 = vrcp.pop %v3002
    %v3050 = vmul.f32 1.0, %v3049
    %v3051 = vrcp.pop %v3003
    %v3052 = vmul.f32 1.0, %v3051
    %v3053 = vrcp.pop %v3004
    %v3054 = vmul.f32 1.0, %v3053
    %v3055 = vrcp.pop %v3005
    %v3056 = vmul.f32 1.0, %v3055
    %v3057 = vrcp.pop %v3006
    %v3058 = vmul.f32 1.0, %v3057
    %v3059 = vrcp.pop %v3007
    %v3060 = vmul.f32 1.0, %v3059
    %v3061 = vrcp.pop %v3008
    %v3062 = vmul.f32 1.0, %v3061
    %v3063 = vrcp.pop %v3009
    %v3064 = vmul.f32 1.0, %v3063
    %v3065 = vrcp.pop %v3010
    %v3066 = vmul.f32 1.0, %v3065
    %v3067 = vrcp.pop %v3011
    %v3068 = vmul.f32 1.0, %v3067
    %v3069 = vrcp.pop %v3012
    %v3070 = vmul.f32 1.0, %v3069
    %v3071 = vrcp.pop %v3013
    %v3072 = vmul.f32 1.0, %v3071
    %v3073 = vrcp.pop %v3014
    %v3074 = vmul.f32 1.0, %v3073
    %v3075 = vrcp.pop %v3015
    %v3076 = vmul.f32 1.0, %v3075
    %v3077 = vrcp.pop %v3016
    %v3078 = vmul.f32 1.0, %v3077
    %v3079 = vrcp.pop %v3017
    %v3080 = vmul.f32 1.0, %v3079
    %v3081 = vrcp.pop %v3018
    %v3082 = vmul.f32 1.0, %v3081
    %vm3083 = vcmask 7168
    %3084 = vst.msk [vmem:[%s7] sm:$0xff] %vm3083, %v3020
    %3085 = vst.msk [vmem:[%s7 + $0x8] sm:$0xff] %vm3083, %v3022
    %3086 = vst.msk [vmem:[%s7 + $0x10] sm:$0xff] %vm3083, %v3024
    %3087 = vst.msk [vmem:[%s7 + $0x18] sm:$0xff] %vm3083, %v3026
    %3088 = vst.msk [vmem:[%s7 + $0x20] sm:$0xff] %vm3083, %v3028
    %3089 = vst.msk [vmem:[%s7 + $0x28] sm:$0xff] %vm3083, %v3030
    %3090 = vst.msk [vmem:[%s7 + $0x30] sm:$0xff] %vm3083, %v3032
    %3091 = vst.msk [vmem:[%s7 + $0x38] sm:$0xff] %vm3083, %v3034
    %3092 = vst.msk [vmem:[%s7 + $0x40] sm:$0xff] %vm3083, %v3036
    %3093 = vst.msk [vmem:[%s7 + $0x48] sm:$0xff] %vm3083, %v3038
    %3094 = vst.msk [vmem:[%s7 + $0x50] sm:$0xff] %vm3083, %v3040
    %3095 = vst.msk [vmem:[%s7 + $0x58] sm:$0xff] %vm3083, %v3042
    %3096 = vst.msk [vmem:[%s7 + $0x60] sm:$0xff] %vm3083, %v3044
    %3097 = vst.msk [vmem:[%s7 + $0x68] sm:$0xff] %vm3083, %v3046
    %3098 = vst.msk [vmem:[%s7 + $0x70] sm:$0xff] %vm3083, %v3048
    %3099 = vst.msk [vmem:[%s7 + $0x78] sm:$0xff] %vm3083, %v3050
    %3100 = vst.msk [vmem:[%s7 + $0x80] sm:$0xff] %vm3083, %v3052
    %3101 = vst.msk [vmem:[%s7 + $0x88] sm:$0xff] %vm3083, %v3054
    %3102 = vst.msk [vmem:[%s7 + $0x90] sm:$0xff] %vm3083, %v3056
    %3103 = vst.msk [vmem:[%s7 + $0x98] sm:$0xff] %vm3083, %v3058
    %3104 = vst.msk [vmem:[%s7 + $0xa0] sm:$0xff] %vm3083, %v3060
    %3105 = vst.msk [vmem:[%s7 + $0xa8] sm:$0xff] %vm3083, %v3062
    %3106 = vst.msk [vmem:[%s7 + $0xb0] sm:$0xff] %vm3083, %v3064
    %3107 = vst.msk [vmem:[%s7 + $0xb8] sm:$0xff] %vm3083, %v3066
    %3108 = vst.msk [vmem:[%s7 + $0xc0] sm:$0xff] %vm3083, %v3068
    %3109 = vst.msk [vmem:[%s7 + $0xc8] sm:$0xff] %vm3083, %v3070
    %3110 = vst.msk [vmem:[%s7 + $0xd0] sm:$0xff] %vm3083, %v3072
    %3111 = vst.msk [vmem:[%s7 + $0xd8] sm:$0xff] %vm3083, %v3074
    %3112 = vst.msk [vmem:[%s7 + $0xe0] sm:$0xff] %vm3083, %v3076
    %3113 = vst.msk [vmem:[%s7 + $0xe8] sm:$0xff] %vm3083, %v3078
    %3114 = vst.msk [vmem:[%s7 + $0xf0] sm:$0xff] %vm3083, %v3080
    %3115 = vst.msk [vmem:[%s7 + $0xf8] sm:$0xff] %vm3083, %v3082
    // Predicated region
    $region34: #{tpu_custom_call.1} parent=1 // pred_check
      _
    $region35: #{tpu_custom_call.1} parent=1 // pred_check_branch
      %3117 = sbr.rel (0) target = $region37
    $region36: #{tpu_custom_call.1} parent=1 // pred_region
      _
    $region37: #{tpu_custom_call.1} parent=1 // pred_fallthru
      _
    // Predicated region
    $region38: #{tpu_custom_call.1} parent=1 // pred_check
      _
    $region39: #{tpu_custom_call.1} parent=1 // pred_check_branch
      %3119 = sbr.rel (0) target = $region41
    $region40: #{tpu_custom_call.1} parent=1 // pred_region
      _
    $region41: #{tpu_custom_call.1} parent=1 // pred_fallthru
      _
    %3120 = vsyncpa [#allocation4], 1

</llo_original>
